<compile_context>
chip_gen: v7x
topology: tpu7x:2x2x1
jax: 0.10.0
libtpu: 0.0.40
codegen_flags: <defaults>
</compile_context>

<pallas_src>
import jax
import jax.numpy as jnp
from jax.experimental import pallas as pl
from jax.experimental.pallas import tpu as pltpu


def _round_up(x, m):
    return ((x + m - 1) // m) * m


def _dqn_kernel(x_ref, w1_ref, b1_ref, w2_ref, b2_ref, o_ref):
    # x_ref: (tb, PACK*d_in) f32,  w1_ref: (PACK*d_in, PACK*H) block-diag f32
    h = jnp.dot(x_ref[...], w1_ref[...], preferred_element_type=jnp.float32)
    h = jnp.maximum(h + b1_ref[...], 0.0)
    # w2_ref: (PACK*H, PACK*d_out=128) block-diag f32 -> lane-dense output.
    out = jnp.dot(h, w2_ref[...], preferred_element_type=jnp.float32)
    o_ref[...] = (out + b2_ref[...]).astype(o_ref.dtype)


def pack_dqn_params(w1, b1, w2, b2, *, lanes=128):
    """One-time weight prep: block-diagonal expansion for lane-packed batch rows.

    w1: (d_in, H), b1: (1, H), w2: (H, d_out), b2: (1, d_out) -- the transpose
    of PyTorch's (out_features, in_features) storage, so the kernel does
    x @ W + b.  Call this once (and again after every optimizer step if the
    parameters change); do NOT call it per forward.
    """
    d_in, hidden = w1.shape
    d_out = w2.shape[1]
    # TODO(synk): d_out values that do not divide 128 would need a lane-padded
    # fallback path; not needed for this module (d_out = 4).
    assert lanes % d_out == 0, "output_dim must divide 128 for lane packing"
    pack = lanes // d_out

    eye = jnp.eye(pack, dtype=jnp.float32)
    w1p = jnp.kron(eye, w1.astype(jnp.float32))          # (pack*d_in, pack*H)
    w2p = jnp.kron(eye, w2.astype(jnp.float32))          # (pack*H,   pack*d_out)
    b1p = jnp.tile(b1.astype(jnp.float32).reshape(1, hidden), (1, pack))
    b2p = jnp.tile(b2.astype(jnp.float32).reshape(1, d_out), (1, pack))
    return (w1p, b1p, w2p, b2p), pack


def dqn_forward(state, packed_weights, pack, *, tile_rows=8192):
    """2-layer MLP forward (Linear -> ReLU -> Linear) as one Pallas kernel.

    state: (B, d_in) f32; packed_weights from pack_dqn_params.
    Returns (B, d_out) f32.

    Note: for tiny online action-selection batches the pallas_call fixed
    overhead dominates; this path is aimed at the large replay/training batch.
    """
    w1p, b1p, w2p, b2p = packed_weights
    B, d_in = state.shape
    din_p, hid_p = w1p.shape
    dout_p = w2p.shape[1]
    d_out = dout_p // pack
    assert din_p == pack * d_in

    # Pad B so packed rows are a multiple of 8 sublanes (at most pack*8-1 rows
    # of zeros; negligible for training batches, sliced off at the end).
    row_align = pack * 8
    B_pad = _round_up(B, row_align)
    x = state if B_pad == B else jnp.pad(state, ((0, B_pad - B), (0, 0)))
    Bp = B_pad // pack
    xp = x.reshape(Bp, din_p)  # contiguous row-major view -> free

    # Packed-row tile: big enough to amortize ~0.35us per grid step, small
    # enough that double-buffered stream tiles stay tiny on every generation.
    tbp = min(Bp, max(8, (tile_rows // pack) // 8 * 8))
    # Guarantee >= 2 grid steps when the batch allows it so the "parallel"
    # batch axis can shard across v7x's 2 TensorCores.
    if tbp >= Bp and Bp >= 16:
        tbp = _round_up(Bp // 2, 8)
    grid = (pl.cdiv(Bp, tbp),)

    out_p = pl.pallas_call(
        _dqn_kernel,
        out_shape=jax.ShapeDtypeStruct((Bp, dout_p), jnp.float32),
        grid_spec=pltpu.PrefetchScalarGridSpec(
            num_scalar_prefetch=0,
            grid=grid,
            in_specs=[
                # Activation stream: tiled over packed batch rows, pipelined.
                pl.BlockSpec((tbp, din_p), lambda i: (i, 0)),
                # Weights / biases: constant index_map -> fetched once,
                # resident in VMEM across all grid steps.
                pl.BlockSpec((din_p, hid_p), lambda i: (0, 0)),
                pl.BlockSpec((1, hid_p), lambda i: (0, 0)),
                pl.BlockSpec((hid_p, dout_p), lambda i: (0, 0)),
                pl.BlockSpec((1, dout_p), lambda i: (0, 0)),
            ],
            out_specs=pl.BlockSpec((tbp, dout_p), lambda i: (i, 0)),
        ),
        compiler_params=pltpu.CompilerParams(
            dimension_semantics=("parallel",),
        ),
    )(xp, w1p, b1p, w2p, b2p)

    # (Bp, pack*d_out) -> (B_pad, d_out) is a free contiguous view; only slice
    # if we actually padded.
    out = out_p.reshape(B_pad, d_out)
    if B_pad != B:
        out = out[:B]
    return out


def init_dqn_params(key, input_dim, hidden_dim, output_dim):
    """Deterministic init mimicking nn.Linear's U(-1/sqrt(fan_in), 1/sqrt(fan_in))."""
    k1, k2, k3, k4 = jax.random.split(key, 4)
    bound1 = 1.0 / jnp.sqrt(jnp.float32(input_dim))
    bound2 = 1.0 / jnp.sqrt(jnp.float32(hidden_dim))
    w1 = jax.random.uniform(k1, (input_dim, hidden_dim), jnp.float32, -bound1, bound1)
    b1 = jax.random.uniform(k2, (1, hidden_dim), jnp.float32, -bound1, bound1)
    w2 = jax.random.uniform(k3, (hidden_dim, output_dim), jnp.float32, -bound2, bound2)
    b2 = jax.random.uniform(k4, (1, output_dim), jnp.float32, -bound2, bound2)
    return w1, b1, w2, b2


if __name__ == "__main__":
    # Shapes consistent with DQN(input_dim=(16,), output_dim=4).
    batch = 256
    input_dim = 16
    hidden_dim = 32
    output_dim = 4

    key = jax.random.PRNGKey(0)
    k_params, k_state = jax.random.split(key)
    w1, b1, w2, b2 = init_dqn_params(k_params, input_dim, hidden_dim, output_dim)
    state = jax.random.normal(k_state, (batch, input_dim), dtype=jnp.float32)

    # Weight prep hoisted out of the forward path (done once).
    packed_weights, pack = pack_dqn_params(w1, b1, w2, b2)

    out = dqn_forward(state, packed_weights, pack)
    out = jax.block_until_ready(out)

    # Pure-JAX f32 reference.  Tolerance allows for MXU default-precision
    # rounding of the f32 matmuls.
    ref = jnp.maximum(state @ w1 + b1, 0.0) @ w2 + b2
    assert out.shape == (batch, output_dim)
    assert jnp.allclose(out, ref, atol=5e-2, rtol=5e-2)

    print("KERNEL_OK")
</pallas_src>

<mosaic_0001>
module attributes {stable_mosaic.version = 11 : i64} {
  func.func @_dqn_kernel(%arg0: i32, %arg1: memref<8x512xf32, #tpu.memory_space<vmem>>, %arg2: memref<512x1024xf32, #tpu.memory_space<vmem>>, %arg3: memref<1x1024xf32, #tpu.memory_space<vmem>>, %arg4: memref<1024x128xf32, #tpu.memory_space<vmem>>, %arg5: memref<1x128xf32, #tpu.memory_space<vmem>>, %arg6: memref<8x128xf32, #tpu.memory_space<vmem>>) attributes {dimension_semantics = [#tpu.dimension_semantics<parallel>], iteration_bounds = array<i64: 1>, scalar_prefetch = 0 : i64, scratch_operands = 0 : i64, tpu.core_type = #tpu.core_type<tc>, window_params = [{transform_indices = @transform_0, window_bounds = array<i64: 8, 512>}, {pipeline_mode = #tpu.pipeline_mode<synchronous>, transform_indices = @transform_1, window_bounds = array<i64: 512, 1024>}, {pipeline_mode = #tpu.pipeline_mode<synchronous>, transform_indices = @transform_2, window_bounds = array<i64: 1, 1024>}, {pipeline_mode = #tpu.pipeline_mode<synchronous>, transform_indices = @transform_3, window_bounds = array<i64: 1024, 128>}, {pipeline_mode = #tpu.pipeline_mode<synchronous>, transform_indices = @transform_4, window_bounds = array<i64: 1, 128>}, {transform_indices = @transform_5, window_bounds = array<i64: 8, 128>}]} {
    %c0 = arith.constant 0 : index
    %c0_0 = arith.constant 0 : index
    %0 = vector.load %arg1[%c0, %c0_0] : memref<8x512xf32, #tpu.memory_space<vmem>>, vector<8x512xf32>
    %c0_1 = arith.constant 0 : index
    %c0_2 = arith.constant 0 : index
    %1 = vector.load %arg2[%c0_1, %c0_2] : memref<512x1024xf32, #tpu.memory_space<vmem>>, vector<512x1024xf32>
    %cst = arith.constant dense<0.000000e+00> : vector<8x1024xf32>
    %2 = tpu.matmul %0, %1, %cst {dimension_numbers = #tpu.dot_dimension_numbers<[1], [0], [0], [1], [0, 0, 1, 1], [], []>} : vector<8x512xf32>, vector<512x1024xf32>, vector<8x1024xf32> -> vector<8x1024xf32>
    %c0_3 = arith.constant 0 : index
    %c0_4 = arith.constant 0 : index
    %3 = vector.load %arg3[%c0_3, %c0_4] : memref<1x1024xf32, #tpu.memory_space<vmem>>, vector<1x1024xf32>
    %4 = vector.broadcast %3 : vector<1x1024xf32> to vector<8x1024xf32>
    %5 = arith.addf %2, %4 : vector<8x1024xf32>
    %cst_5 = arith.constant 0.000000e+00 : f32
    %6 = vector.broadcast %cst_5 : f32 to vector<8x1024xf32>
    %7 = arith.maximumf %5, %6 : vector<8x1024xf32>
    %c0_6 = arith.constant 0 : index
    %c0_7 = arith.constant 0 : index
    %8 = vector.load %arg4[%c0_6, %c0_7] : memref<1024x128xf32, #tpu.memory_space<vmem>>, vector<1024x128xf32>
    %cst_8 = arith.constant dense<0.000000e+00> : vector<8x128xf32>
    %9 = tpu.matmul %7, %8, %cst_8 {dimension_numbers = #tpu.dot_dimension_numbers<[1], [0], [0], [1], [0, 0, 1, 1], [], []>} : vector<8x1024xf32>, vector<1024x128xf32>, vector<8x128xf32> -> vector<8x128xf32>
    %c0_9 = arith.constant 0 : index
    %c0_10 = arith.constant 0 : index
    %10 = vector.load %arg5[%c0_9, %c0_10] : memref<1x128xf32, #tpu.memory_space<vmem>>, vector<1x128xf32>
    %11 = vector.broadcast %10 : vector<1x128xf32> to vector<8x128xf32>
    %12 = arith.addf %9, %11 : vector<8x128xf32>
    %c0_11 = arith.constant 0 : index
    %c0_12 = arith.constant 0 : index
    %13 = vector.load %arg6[%c0_11, %c0_12] : memref<8x128xf32, #tpu.memory_space<vmem>>, vector<8x128xf32>
    tpu.vector_store %arg6[%c0_11, %c0_12], %12 {strides = array<i32>} : memref<8x128xf32, #tpu.memory_space<vmem>>, vector<8x128xf32>,
    return
  }
  func.func @transform_0(%arg0: i32) -> (i32, i32) {
    %c0_i32 = arith.constant 0 : i32
    %c0_i32_0 = arith.constant 0 : i32
    return %arg0, %c0_i32 : i32, i32
  }
  func.func @transform_1(%arg0: i32) -> (i32, i32) {
    %c0_i32 = arith.constant 0 : i32
    %c0_i32_0 = arith.constant 0 : i32
    %c0_i32_1 = arith.constant 0 : i32
    return %c0_i32, %c0_i32_0 : i32, i32
  }
  func.func @transform_2(%arg0: i32) -> (i32, i32) {
    %c0_i32 = arith.constant 0 : i32
    %c0_i32_0 = arith.constant 0 : i32
    %c0_i32_1 = arith.constant 0 : i32
    return %c0_i32, %c0_i32_0 : i32, i32
  }
  func.func @transform_3(%arg0: i32) -> (i32, i32) {
    %c0_i32 = arith.constant 0 : i32
    %c0_i32_0 = arith.constant 0 : i32
    %c0_i32_1 = arith.constant 0 : i32
    return %c0_i32, %c0_i32_0 : i32, i32
  }
  func.func @transform_4(%arg0: i32) -> (i32, i32) {
    %c0_i32 = arith.constant 0 : i32
    %c0_i32_0 = arith.constant 0 : i32
    %c0_i32_1 = arith.constant 0 : i32
    return %c0_i32, %c0_i32_0 : i32, i32
  }
  func.func @transform_5(%arg0: i32) -> (i32, i32) {
    %c0_i32 = arith.constant 0 : i32
    %c0_i32_0 = arith.constant 0 : i32
    return %arg0, %c0_i32 : i32, i32
  }
}

</mosaic_0001>

<llo_original>
// kernel: tpu_custom_call.1
$region0: #{tpu_custom_call.1}
  #allocation0 [shape = 'u32[]', space=smem, size = 0x4, offset = 0x4, fixed_abs, tag = 'smem constant byte address 0x4 - core index']
  #allocation1 [shape = 'u32[144,128]{1,0:T(1,128)}', space=vmem, size = 0x12000, scoped, tag = 'internal scratch']
  %s0 = inlined_call_operand.hbm [shape: f32[8,512], index: 0, kind: input, shape index: {}]
  %s1 = inlined_call_operand.hbm [shape: f32[512,1024], index: 1, kind: input, shape index: {}]
  %s2 = inlined_call_operand.hbm [shape: f32[1,1024], index: 2, kind: input, shape index: {}]
  %s3 = inlined_call_operand.hbm [shape: f32[1024,128], index: 3, kind: input, shape index: {}]
  %s4 = inlined_call_operand.hbm [shape: f32[1,128], index: 4, kind: input, shape index: {}]
  %s5 = inlined_call_operand.hbm [shape: f32[8,128], index: 5, kind: output, shape index: {}]
  %s6 = sld [smem:[#allocation0]]
  $region50: #{tpu_custom_call.1} parent=0
    _
  %s8 = ssub.s32 1, %s6
  %s9 = scalar_select 0, %s8, %s6
  $region1: #{tpu_custom_call.1} parent=0
    #allocation2 [shape = 'u8[16384]{0}', space=vmem, size = 0x4000, scoped, tag = 'input window, operand 0, single buffered']
    #allocation3 [shape = 's32[1]{0}', space=sflag, size = 0x4, scoped, tag = 'scoped memory for tpu_custom_call.1']
    #allocation4 [shape = 's32[1]{0}', space=sflag, size = 0x4, scoped, tag = 'scoped memory for tpu_custom_call.1']
    #allocation5 [shape = 'u8[2097152]{0}', space=vmem, size = 0x200000, scoped, tag = 'input window, operand 1, single buffered']
    #allocation6 [shape = 's32[1]{0}', space=sflag, size = 0x4, scoped, tag = 'scoped memory for tpu_custom_call.1']
    #allocation7 [shape = 'u8[4096]{0}', space=vmem, size = 0x1000, scoped, tag = 'input window, operand 2, single buffered']
    #allocation8 [shape = 'u8[524288]{0}', space=vmem, size = 0x80000, scoped, tag = 'input window, operand 3, single buffered']
    #allocation9 [shape = 's32[1]{0}', space=sflag, size = 0x4, scoped, tag = 'scoped memory for tpu_custom_call.1']
    #allocation10 [shape = 'u8[512]{0}', space=vmem, size = 0x400, scoped, tag = 'input window, operand 4, single buffered']
    #allocation11 [shape = 'u8[4096]{0}', space=vmem, size = 0x1000, scoped, tag = 'output window, operand 0, single buffered']
    %10 = vsyncpa [#allocation3], 0
    %11 = vsyncpa [#allocation6], 0
    %12 = vsyncpa [#allocation9], 0
    %13 = vsyncpa [#allocation4], 0
    // Predicated region
    $region2: #{tpu_custom_call.1} parent=1 // pred_check
      _
    $region3: #{tpu_custom_call.1} parent=1 // pred_check_branch
      %15 = sbr.rel (0) target = $region5
    $region4: #{tpu_custom_call.1} parent=1 // pred_region
      %s17 = ssub.s32 512, 512
      %18 = vsyncadd [#allocation3], %s17
      %s20 = sshll.u32 [#allocation2], 4
      %s21 = int_to_ptr.vmem [resolvable:$true] %s20
      %23 = dma.hbm_to_vmem [thread:$0]  %s0, 512, %s21, [#allocation3]
    $region5: #{tpu_custom_call.1} parent=1 // pred_fallthru
      _
    // Predicated region
    $region6: #{tpu_custom_call.1} parent=1 // pred_check
      _
    $region7: #{tpu_custom_call.1} parent=1 // pred_check_branch
      %25 = sbr.rel (0) target = $region9
    $region8: #{tpu_custom_call.1} parent=1 // pred_region
      %s27 = ssub.s32 65536, 65536
      %28 = vsyncadd [#allocation6], %s27
      %s29 = sshll.u32 [#allocation5], 4
      %s30 = int_to_ptr.vmem [resolvable:$true] %s29
      %35 = dma.hbm_to_vmem [thread:$0]  %s1, 65536, %s30, [#allocation6], 1024, 1024, 64
    $region9: #{tpu_custom_call.1} parent=1 // pred_fallthru
      _
    // Predicated region
    $region10: #{tpu_custom_call.1} parent=1 // pred_check
      _
    $region11: #{tpu_custom_call.1} parent=1 // pred_check_branch
      %37 = sbr.rel (0) target = $region13
    $region12: #{tpu_custom_call.1} parent=1 // pred_region
      %s39 = ssub.s32 128, 128
      %40 = vsyncadd [#allocation6], %s39
      %s42 = sshll.u32 [#allocation7], 4
      %s43 = int_to_ptr.vmem [resolvable:$true] %s42
      %45 = dma.hbm_to_vmem [thread:$0]  %s2, 128, %s43, [#allocation6]
    $region13: #{tpu_custom_call.1} parent=1 // pred_fallthru
      _
    // Predicated region
    $region14: #{tpu_custom_call.1} parent=1 // pred_check
      _
    $region15: #{tpu_custom_call.1} parent=1 // pred_check_branch
      %47 = sbr.rel (0) target = $region17
    $region16: #{tpu_custom_call.1} parent=1 // pred_region
      %s49 = ssub.s32 16384, 16384
      %50 = vsyncadd [#allocation9], %s49
      %s51 = sshll.u32 [#allocation8], 4
      %s52 = int_to_ptr.vmem [resolvable:$true] %s51
      %57 = dma.hbm_to_vmem [thread:$0]  %s3, 16384, %s52, [#allocation9], 128, 128, 8
    $region17: #{tpu_custom_call.1} parent=1 // pred_fallthru
      _
    // Predicated region
    $region18: #{tpu_custom_call.1} parent=1 // pred_check
      _
    $region19: #{tpu_custom_call.1} parent=1 // pred_check_branch
      %59 = sbr.rel (0) target = $region21
    $region20: #{tpu_custom_call.1} parent=1 // pred_region
      %s61 = ssub.s32 16, 16
      %62 = vsyncadd [#allocation9], %s61
      %s64 = sshll.u32 [#allocation10], 4
      %s65 = int_to_ptr.vmem [resolvable:$true] %s64
      %67 = dma.hbm_to_vmem [thread:$0]  %s4, 16, %s65, [#allocation9]
    $region21: #{tpu_custom_call.1} parent=1 // pred_fallthru
      _
    // Predicated region
    $region22: #{tpu_custom_call.1} parent=1 // pred_check
      _
    $region23: #{tpu_custom_call.1} parent=1 // pred_check_branch
      %69 = sbr.rel (0) target = $region25
    $region24: #{tpu_custom_call.1} parent=1 // pred_region
      %70 = dma.done [#allocation3], 512
    $region25: #{tpu_custom_call.1} parent=1 // pred_fallthru
      _
    // Predicated region
    $region26: #{tpu_custom_call.1} parent=1 // pred_check
      _
    $region27: #{tpu_custom_call.1} parent=1 // pred_check_branch
      %72 = sbr.rel (0) target = $region29
    $region28: #{tpu_custom_call.1} parent=1 // pred_region
      %73 = dma.done [#allocation6], 65536
    $region29: #{tpu_custom_call.1} parent=1 // pred_fallthru
      _
    // Predicated region
    $region30: #{tpu_custom_call.1} parent=1 // pred_check
      _
    $region31: #{tpu_custom_call.1} parent=1 // pred_check_branch
      %75 = sbr.rel (0) target = $region33
    $region32: #{tpu_custom_call.1} parent=1 // pred_region
      %76 = dma.done [#allocation6], 128
    $region33: #{tpu_custom_call.1} parent=1 // pred_fallthru
      _
    // Predicated region
    $region34: #{tpu_custom_call.1} parent=1 // pred_check
      _
    $region35: #{tpu_custom_call.1} parent=1 // pred_check_branch
      %78 = sbr.rel (0) target = $region37
    $region36: #{tpu_custom_call.1} parent=1 // pred_region
      %79 = dma.done [#allocation9], 16384
    $region37: #{tpu_custom_call.1} parent=1 // pred_fallthru
      _
    // Predicated region
    $region38: #{tpu_custom_call.1} parent=1 // pred_check
      _
    $region39: #{tpu_custom_call.1} parent=1 // pred_check_branch
      %81 = sbr.rel (0) target = $region41
    $region40: #{tpu_custom_call.1} parent=1 // pred_region
      %82 = dma.done [#allocation9], 16
    $region41: #{tpu_custom_call.1} parent=1 // pred_fallthru
      _
    %v83 = vld [vmem:[#allocation2] sm:$0xff]
    %v84 = vld [vmem:[#allocation2 + $0x8] sm:$0xff]
    %v85 = vld [vmem:[#allocation2 + $0x10] sm:$0xff]
    %v86 = vld [vmem:[#allocation2 + $0x18] sm:$0xff]
    %v87 = vld [vmem:[#allocation5] sm:$0xff]
    %v88 = vld [vmem:[#allocation5 + $0x8] sm:$0xff]
    %v89 = vld [vmem:[#allocation5 + $0x10] sm:$0xff]
    %v90 = vld [vmem:[#allocation5 + $0x18] sm:$0xff]
    %v91 = vld [vmem:[#allocation5 + $0x20] sm:$0xff]
    %v92 = vld [vmem:[#allocation5 + $0x28] sm:$0xff]
    %v93 = vld [vmem:[#allocation5 + $0x30] sm:$0xff]
    %v94 = vld [vmem:[#allocation5 + $0x38] sm:$0xff]
    %v95 = vld [vmem:[#allocation5 + $0x40] sm:$0xff]
    %v96 = vld [vmem:[#allocation5 + $0x48] sm:$0xff]
    %v97 = vld [vmem:[#allocation5 + $0x50] sm:$0xff]
    %v98 = vld [vmem:[#allocation5 + $0x58] sm:$0xff]
    %v99 = vld [vmem:[#allocation5 + $0x60] sm:$0xff]
    %v100 = vld [vmem:[#allocation5 + $0x68] sm:$0xff]
    %v101 = vld [vmem:[#allocation5 + $0x70] sm:$0xff]
    %v102 = vld [vmem:[#allocation5 + $0x78] sm:$0xff]
    %v103 = vld [vmem:[#allocation5 + $0x80] sm:$0xff]
    %v104 = vld [vmem:[#allocation5 + $0x88] sm:$0xff]
    %v105 = vld [vmem:[#allocation5 + $0x90] sm:$0xff]
    %v106 = vld [vmem:[#allocation5 + $0x98] sm:$0xff]
    %v107 = vld [vmem:[#allocation5 + $0xa0] sm:$0xff]
    %v108 = vld [vmem:[#allocation5 + $0xa8] sm:$0xff]
    %v109 = vld [vmem:[#allocation5 + $0xb0] sm:$0xff]
    %v110 = vld [vmem:[#allocation5 + $0xb8] sm:$0xff]
    %v111 = vld [vmem:[#allocation5 + $0xc0] sm:$0xff]
    %v112 = vld [vmem:[#allocation5 + $0xc8] sm:$0xff]
    %v113 = vld [vmem:[#allocation5 + $0xd0] sm:$0xff]
    %v114 = vld [vmem:[#allocation5 + $0xd8] sm:$0xff]
    %v115 = vld [vmem:[#allocation5 + $0xe0] sm:$0xff]
    %v116 = vld [vmem:[#allocation5 + $0xe8] sm:$0xff]
    %v117 = vld [vmem:[#allocation5 + $0xf0] sm:$0xff]
    %v118 = vld [vmem:[#allocation5 + $0xf8] sm:$0xff]
    %v119 = vld [vmem:[#allocation5 + $0x100] sm:$0xff]
    %v120 = vld [vmem:[#allocation5 + $0x108] sm:$0xff]
    %v121 = vld [vmem:[#allocation5 + $0x110] sm:$0xff]
    %v122 = vld [vmem:[#allocation5 + $0x118] sm:$0xff]
    %v123 = vld [vmem:[#allocation5 + $0x120] sm:$0xff]
    %v124 = vld [vmem:[#allocation5 + $0x128] sm:$0xff]
    %v125 = vld [vmem:[#allocation5 + $0x130] sm:$0xff]
    %v126 = vld [vmem:[#allocation5 + $0x138] sm:$0xff]
    %v127 = vld [vmem:[#allocation5 + $0x140] sm:$0xff]
    %v128 = vld [vmem:[#allocation5 + $0x148] sm:$0xff]
    %v129 = vld [vmem:[#allocation5 + $0x150] sm:$0xff]
    %v130 = vld [vmem:[#allocation5 + $0x158] sm:$0xff]
    %v131 = vld [vmem:[#allocation5 + $0x160] sm:$0xff]
    %v132 = vld [vmem:[#allocation5 + $0x168] sm:$0xff]
    %v133 = vld [vmem:[#allocation5 + $0x170] sm:$0xff]
    %v134 = vld [vmem:[#allocation5 + $0x178] sm:$0xff]
    %v135 = vld [vmem:[#allocation5 + $0x180] sm:$0xff]
    %v136 = vld [vmem:[#allocation5 + $0x188] sm:$0xff]
    %v137 = vld [vmem:[#allocation5 + $0x190] sm:$0xff]
    %v138 = vld [vmem:[#allocation5 + $0x198] sm:$0xff]
    %v139 = vld [vmem:[#allocation5 + $0x1a0] sm:$0xff]
    %v140 = vld [vmem:[#allocation5 + $0x1a8] sm:$0xff]
    %v141 = vld [vmem:[#allocation5 + $0x1b0] sm:$0xff]
    %v142 = vld [vmem:[#allocation5 + $0x1b8] sm:$0xff]
    %v143 = vld [vmem:[#allocation5 + $0x1c0] sm:$0xff]
    %v144 = vld [vmem:[#allocation5 + $0x1c8] sm:$0xff]
    %v145 = vld [vmem:[#allocation5 + $0x1d0] sm:$0xff]
    %v146 = vld [vmem:[#allocation5 + $0x1d8] sm:$0xff]
    %v147 = vld [vmem:[#allocation5 + $0x1e0] sm:$0xff]
    %v148 = vld [vmem:[#allocation5 + $0x1e8] sm:$0xff]
    %v149 = vld [vmem:[#allocation5 + $0x1f0] sm:$0xff]
    %v150 = vld [vmem:[#allocation5 + $0x1f8] sm:$0xff]
    %v151 = vld [vmem:[#allocation5 + $0x200] sm:$0xff]
    %v152 = vld [vmem:[#allocation5 + $0x208] sm:$0xff]
    %v153 = vld [vmem:[#allocation5 + $0x210] sm:$0xff]
    %v154 = vld [vmem:[#allocation5 + $0x218] sm:$0xff]
    %v155 = vld [vmem:[#allocation5 + $0x220] sm:$0xff]
    %v156 = vld [vmem:[#allocation5 + $0x228] sm:$0xff]
    %v157 = vld [vmem:[#allocation5 + $0x230] sm:$0xff]
    %v158 = vld [vmem:[#allocation5 + $0x238] sm:$0xff]
    %v159 = vld [vmem:[#allocation5 + $0x240] sm:$0xff]
    %v160 = vld [vmem:[#allocation5 + $0x248] sm:$0xff]
    %v161 = vld [vmem:[#allocation5 + $0x250] sm:$0xff]
    %v162 = vld [vmem:[#allocation5 + $0x258] sm:$0xff]
    %v163 = vld [vmem:[#allocation5 + $0x260] sm:$0xff]
    %v164 = vld [vmem:[#allocation5 + $0x268] sm:$0xff]
    %v165 = vld [vmem:[#allocation5 + $0x270] sm:$0xff]
    %v166 = vld [vmem:[#allocation5 + $0x278] sm:$0xff]
    %v167 = vld [vmem:[#allocation5 + $0x280] sm:$0xff]
    %v168 = vld [vmem:[#allocation5 + $0x288] sm:$0xff]
    %v169 = vld [vmem:[#allocation5 + $0x290] sm:$0xff]
    %v170 = vld [vmem:[#allocation5 + $0x298] sm:$0xff]
    %v171 = vld [vmem:[#allocation5 + $0x2a0] sm:$0xff]
    %v172 = vld [vmem:[#allocation5 + $0x2a8] sm:$0xff]
    %v173 = vld [vmem:[#allocation5 + $0x2b0] sm:$0xff]
    %v174 = vld [vmem:[#allocation5 + $0x2b8] sm:$0xff]
    %v175 = vld [vmem:[#allocation5 + $0x2c0] sm:$0xff]
    %v176 = vld [vmem:[#allocation5 + $0x2c8] sm:$0xff]
    %v177 = vld [vmem:[#allocation5 + $0x2d0] sm:$0xff]
    %v178 = vld [vmem:[#allocation5 + $0x2d8] sm:$0xff]
    %v179 = vld [vmem:[#allocation5 + $0x2e0] sm:$0xff]
    %v180 = vld [vmem:[#allocation5 + $0x2e8] sm:$0xff]
    %v181 = vld [vmem:[#allocation5 + $0x2f0] sm:$0xff]
    %v182 = vld [vmem:[#allocation5 + $0x2f8] sm:$0xff]
    %v183 = vld [vmem:[#allocation5 + $0x300] sm:$0xff]
    %v184 = vld [vmem:[#allocation5 + $0x308] sm:$0xff]
    %v185 = vld [vmem:[#allocation5 + $0x310] sm:$0xff]
    %v186 = vld [vmem:[#allocation5 + $0x318] sm:$0xff]
    %v187 = vld [vmem:[#allocation5 + $0x320] sm:$0xff]
    %v188 = vld [vmem:[#allocation5 + $0x328] sm:$0xff]
    %v189 = vld [vmem:[#allocation5 + $0x330] sm:$0xff]
    %v190 = vld [vmem:[#allocation5 + $0x338] sm:$0xff]
    %v191 = vld [vmem:[#allocation5 + $0x340] sm:$0xff]
    %v192 = vld [vmem:[#allocation5 + $0x348] sm:$0xff]
    %v193 = vld [vmem:[#allocation5 + $0x350] sm:$0xff]
    %v194 = vld [vmem:[#allocation5 + $0x358] sm:$0xff]
    %v195 = vld [vmem:[#allocation5 + $0x360] sm:$0xff]
    %v196 = vld [vmem:[#allocation5 + $0x368] sm:$0xff]
    %v197 = vld [vmem:[#allocation5 + $0x370] sm:$0xff]
    %v198 = vld [vmem:[#allocation5 + $0x378] sm:$0xff]
    %v199 = vld [vmem:[#allocation5 + $0x380] sm:$0xff]
    %v200 = vld [vmem:[#allocation5 + $0x388] sm:$0xff]
    %v201 = vld [vmem:[#allocation5 + $0x390] sm:$0xff]
    %v202 = vld [vmem:[#allocation5 + $0x398] sm:$0xff]
    %v203 = vld [vmem:[#allocation5 + $0x3a0] sm:$0xff]
    %v204 = vld [vmem:[#allocation5 + $0x3a8] sm:$0xff]
    %v205 = vld [vmem:[#allocation5 + $0x3b0] sm:$0xff]
    %v206 = vld [vmem:[#allocation5 + $0x3b8] sm:$0xff]
    %v207 = vld [vmem:[#allocation5 + $0x3c0] sm:$0xff]
    %v208 = vld [vmem:[#allocation5 + $0x3c8] sm:$0xff]
    %v209 = vld [vmem:[#allocation5 + $0x3d0] sm:$0xff]
    %v210 = vld [vmem:[#allocation5 + $0x3d8] sm:$0xff]
    %v211 = vld [vmem:[#allocation5 + $0x3e0] sm:$0xff]
    %v212 = vld [vmem:[#allocation5 + $0x3e8] sm:$0xff]
    %v213 = vld [vmem:[#allocation5 + $0x3f0] sm:$0xff]
    %v214 = vld [vmem:[#allocation5 + $0x3f8] sm:$0xff]
    %v215 = vld [vmem:[#allocation5 + $0x400] sm:$0xff]
    %v216 = vld [vmem:[#allocation5 + $0x408] sm:$0xff]
    %v217 = vld [vmem:[#allocation5 + $0x410] sm:$0xff]
    %v218 = vld [vmem:[#allocation5 + $0x418] sm:$0xff]
    %v219 = vld [vmem:[#allocation5 + $0x420] sm:$0xff]
    %v220 = vld [vmem:[#allocation5 + $0x428] sm:$0xff]
    %v221 = vld [vmem:[#allocation5 + $0x430] sm:$0xff]
    %v222 = vld [vmem:[#allocation5 + $0x438] sm:$0xff]
    %v223 = vld [vmem:[#allocation5 + $0x440] sm:$0xff]
    %v224 = vld [vmem:[#allocation5 + $0x448] sm:$0xff]
    %v225 = vld [vmem:[#allocation5 + $0x450] sm:$0xff]
    %v226 = vld [vmem:[#allocation5 + $0x458] sm:$0xff]
    %v227 = vld [vmem:[#allocation5 + $0x460] sm:$0xff]
    %v228 = vld [vmem:[#allocation5 + $0x468] sm:$0xff]
    %v229 = vld [vmem:[#allocation5 + $0x470] sm:$0xff]
    %v230 = vld [vmem:[#allocation5 + $0x478] sm:$0xff]
    %v231 = vld [vmem:[#allocation5 + $0x480] sm:$0xff]
    %v232 = vld [vmem:[#allocation5 + $0x488] sm:$0xff]
    %v233 = vld [vmem:[#allocation5 + $0x490] sm:$0xff]
    %v234 = vld [vmem:[#allocation5 + $0x498] sm:$0xff]
    %v235 = vld [vmem:[#allocation5 + $0x4a0] sm:$0xff]
    %v236 = vld [vmem:[#allocation5 + $0x4a8] sm:$0xff]
    %v237 = vld [vmem:[#allocation5 + $0x4b0] sm:$0xff]
    %v238 = vld [vmem:[#allocation5 + $0x4b8] sm:$0xff]
    %v239 = vld [vmem:[#allocation5 + $0x4c0] sm:$0xff]
    %v240 = vld [vmem:[#allocation5 + $0x4c8] sm:$0xff]
    %v241 = vld [vmem:[#allocation5 + $0x4d0] sm:$0xff]
    %v242 = vld [vmem:[#allocation5 + $0x4d8] sm:$0xff]
    %v243 = vld [vmem:[#allocation5 + $0x4e0] sm:$0xff]
    %v244 = vld [vmem:[#allocation5 + $0x4e8] sm:$0xff]
    %v245 = vld [vmem:[#allocation5 + $0x4f0] sm:$0xff]
    %v246 = vld [vmem:[#allocation5 + $0x4f8] sm:$0xff]
    %v247 = vld [vmem:[#allocation5 + $0x500] sm:$0xff]
    %v248 = vld [vmem:[#allocation5 + $0x508] sm:$0xff]
    %v249 = vld [vmem:[#allocation5 + $0x510] sm:$0xff]
    %v250 = vld [vmem:[#allocation5 + $0x518] sm:$0xff]
    %v251 = vld [vmem:[#allocation5 + $0x520] sm:$0xff]
    %v252 = vld [vmem:[#allocation5 + $0x528] sm:$0xff]
    %v253 = vld [vmem:[#allocation5 + $0x530] sm:$0xff]
    %v254 = vld [vmem:[#allocation5 + $0x538] sm:$0xff]
    %v255 = vld [vmem:[#allocation5 + $0x540] sm:$0xff]
    %v256 = vld [vmem:[#allocation5 + $0x548] sm:$0xff]
    %v257 = vld [vmem:[#allocation5 + $0x550] sm:$0xff]
    %v258 = vld [vmem:[#allocation5 + $0x558] sm:$0xff]
    %v259 = vld [vmem:[#allocation5 + $0x560] sm:$0xff]
    %v260 = vld [vmem:[#allocation5 + $0x568] sm:$0xff]
    %v261 = vld [vmem:[#allocation5 + $0x570] sm:$0xff]
    %v262 = vld [vmem:[#allocation5 + $0x578] sm:$0xff]
    %v263 = vld [vmem:[#allocation5 + $0x580] sm:$0xff]
    %v264 = vld [vmem:[#allocation5 + $0x588] sm:$0xff]
    %v265 = vld [vmem:[#allocation5 + $0x590] sm:$0xff]
    %v266 = vld [vmem:[#allocation5 + $0x598] sm:$0xff]
    %v267 = vld [vmem:[#allocation5 + $0x5a0] sm:$0xff]
    %v268 = vld [vmem:[#allocation5 + $0x5a8] sm:$0xff]
    %v269 = vld [vmem:[#allocation5 + $0x5b0] sm:$0xff]
    %v270 = vld [vmem:[#allocation5 + $0x5b8] sm:$0xff]
    %v271 = vld [vmem:[#allocation5 + $0x5c0] sm:$0xff]
    %v272 = vld [vmem:[#allocation5 + $0x5c8] sm:$0xff]
    %v273 = vld [vmem:[#allocation5 + $0x5d0] sm:$0xff]
    %v274 = vld [vmem:[#allocation5 + $0x5d8] sm:$0xff]
    %v275 = vld [vmem:[#allocation5 + $0x5e0] sm:$0xff]
    %v276 = vld [vmem:[#allocation5 + $0x5e8] sm:$0xff]
    %v277 = vld [vmem:[#allocation5 + $0x5f0] sm:$0xff]
    %v278 = vld [vmem:[#allocation5 + $0x5f8] sm:$0xff]
    %v279 = vld [vmem:[#allocation5 + $0x600] sm:$0xff]
    %v280 = vld [vmem:[#allocation5 + $0x608] sm:$0xff]
    %v281 = vld [vmem:[#allocation5 + $0x610] sm:$0xff]
    %v282 = vld [vmem:[#allocation5 + $0x618] sm:$0xff]
    %v283 = vld [vmem:[#allocation5 + $0x620] sm:$0xff]
    %v284 = vld [vmem:[#allocation5 + $0x628] sm:$0xff]
    %v285 = vld [vmem:[#allocation5 + $0x630] sm:$0xff]
    %v286 = vld [vmem:[#allocation5 + $0x638] sm:$0xff]
    %v287 = vld [vmem:[#allocation5 + $0x640] sm:$0xff]
    %v288 = vld [vmem:[#allocation5 + $0x648] sm:$0xff]
    %v289 = vld [vmem:[#allocation5 + $0x650] sm:$0xff]
    %v290 = vld [vmem:[#allocation5 + $0x658] sm:$0xff]
    %v291 = vld [vmem:[#allocation5 + $0x660] sm:$0xff]
    %v292 = vld [vmem:[#allocation5 + $0x668] sm:$0xff]
    %v293 = vld [vmem:[#allocation5 + $0x670] sm:$0xff]
    %v294 = vld [vmem:[#allocation5 + $0x678] sm:$0xff]
    %v295 = vld [vmem:[#allocation5 + $0x680] sm:$0xff]
    %v296 = vld [vmem:[#allocation5 + $0x688] sm:$0xff]
    %v297 = vld [vmem:[#allocation5 + $0x690] sm:$0xff]
    %v298 = vld [vmem:[#allocation5 + $0x698] sm:$0xff]
    %v299 = vld [vmem:[#allocation5 + $0x6a0] sm:$0xff]
    %v300 = vld [vmem:[#allocation5 + $0x6a8] sm:$0xff]
    %v301 = vld [vmem:[#allocation5 + $0x6b0] sm:$0xff]
    %v302 = vld [vmem:[#allocation5 + $0x6b8] sm:$0xff]
    %v303 = vld [vmem:[#allocation5 + $0x6c0] sm:$0xff]
    %v304 = vld [vmem:[#allocation5 + $0x6c8] sm:$0xff]
    %v305 = vld [vmem:[#allocation5 + $0x6d0] sm:$0xff]
    %v306 = vld [vmem:[#allocation5 + $0x6d8] sm:$0xff]
    %v307 = vld [vmem:[#allocation5 + $0x6e0] sm:$0xff]
    %v308 = vld [vmem:[#allocation5 + $0x6e8] sm:$0xff]
    %v309 = vld [vmem:[#allocation5 + $0x6f0] sm:$0xff]
    %v310 = vld [vmem:[#allocation5 + $0x6f8] sm:$0xff]
    %v311 = vld [vmem:[#allocation5 + $0x700] sm:$0xff]
    %v312 = vld [vmem:[#allocation5 + $0x708] sm:$0xff]
    %v313 = vld [vmem:[#allocation5 + $0x710] sm:$0xff]
    %v314 = vld [vmem:[#allocation5 + $0x718] sm:$0xff]
    %v315 = vld [vmem:[#allocation5 + $0x720] sm:$0xff]
    %v316 = vld [vmem:[#allocation5 + $0x728] sm:$0xff]
    %v317 = vld [vmem:[#allocation5 + $0x730] sm:$0xff]
    %v318 = vld [vmem:[#allocation5 + $0x738] sm:$0xff]
    %v319 = vld [vmem:[#allocation5 + $0x740] sm:$0xff]
    %v320 = vld [vmem:[#allocation5 + $0x748] sm:$0xff]
    %v321 = vld [vmem:[#allocation5 + $0x750] sm:$0xff]
    %v322 = vld [vmem:[#allocation5 + $0x758] sm:$0xff]
    %v323 = vld [vmem:[#allocation5 + $0x760] sm:$0xff]
    %v324 = vld [vmem:[#allocation5 + $0x768] sm:$0xff]
    %v325 = vld [vmem:[#allocation5 + $0x770] sm:$0xff]
    %v326 = vld [vmem:[#allocation5 + $0x778] sm:$0xff]
    %v327 = vld [vmem:[#allocation5 + $0x780] sm:$0xff]
    %v328 = vld [vmem:[#allocation5 + $0x788] sm:$0xff]
    %v329 = vld [vmem:[#allocation5 + $0x790] sm:$0xff]
    %v330 = vld [vmem:[#allocation5 + $0x798] sm:$0xff]
    %v331 = vld [vmem:[#allocation5 + $0x7a0] sm:$0xff]
    %v332 = vld [vmem:[#allocation5 + $0x7a8] sm:$0xff]
    %v333 = vld [vmem:[#allocation5 + $0x7b0] sm:$0xff]
    %v334 = vld [vmem:[#allocation5 + $0x7b8] sm:$0xff]
    %v335 = vld [vmem:[#allocation5 + $0x7c0] sm:$0xff]
    %v336 = vld [vmem:[#allocation5 + $0x7c8] sm:$0xff]
    %v337 = vld [vmem:[#allocation5 + $0x7d0] sm:$0xff]
    %v338 = vld [vmem:[#allocation5 + $0x7d8] sm:$0xff]
    %v339 = vld [vmem:[#allocation5 + $0x7e0] sm:$0xff]
    %v340 = vld [vmem:[#allocation5 + $0x7e8] sm:$0xff]
    %v341 = vld [vmem:[#allocation5 + $0x7f0] sm:$0xff]
    %v342 = vld [vmem:[#allocation5 + $0x7f8] sm:$0xff]
    %v343 = vld [vmem:[#allocation5 + $0x800] sm:$0xff]
    %v344 = vld [vmem:[#allocation5 + $0x808] sm:$0xff]
    %v345 = vld [vmem:[#allocation5 + $0x810] sm:$0xff]
    %v346 = vld [vmem:[#allocation5 + $0x818] sm:$0xff]
    %v347 = vld [vmem:[#allocation5 + $0x820] sm:$0xff]
    %v348 = vld [vmem:[#allocation5 + $0x828] sm:$0xff]
    %v349 = vld [vmem:[#allocation5 + $0x830] sm:$0xff]
    %v350 = vld [vmem:[#allocation5 + $0x838] sm:$0xff]
    %v351 = vld [vmem:[#allocation5 + $0x840] sm:$0xff]
    %v352 = vld [vmem:[#allocation5 + $0x848] sm:$0xff]
    %v353 = vld [vmem:[#allocation5 + $0x850] sm:$0xff]
    %v354 = vld [vmem:[#allocation5 + $0x858] sm:$0xff]
    %v355 = vld [vmem:[#allocation5 + $0x860] sm:$0xff]
    %v356 = vld [vmem:[#allocation5 + $0x868] sm:$0xff]
    %v357 = vld [vmem:[#allocation5 + $0x870] sm:$0xff]
    %v358 = vld [vmem:[#allocation5 + $0x878] sm:$0xff]
    %v359 = vld [vmem:[#allocation5 + $0x880] sm:$0xff]
    %v360 = vld [vmem:[#allocation5 + $0x888] sm:$0xff]
    %v361 = vld [vmem:[#allocation5 + $0x890] sm:$0xff]
    %v362 = vld [vmem:[#allocation5 + $0x898] sm:$0xff]
    %v363 = vld [vmem:[#allocation5 + $0x8a0] sm:$0xff]
    %v364 = vld [vmem:[#allocation5 + $0x8a8] sm:$0xff]
    %v365 = vld [vmem:[#allocation5 + $0x8b0] sm:$0xff]
    %v366 = vld [vmem:[#allocation5 + $0x8b8] sm:$0xff]
    %v367 = vld [vmem:[#allocation5 + $0x8c0] sm:$0xff]
    %v368 = vld [vmem:[#allocation5 + $0x8c8] sm:$0xff]
    %v369 = vld [vmem:[#allocation5 + $0x8d0] sm:$0xff]
    %v370 = vld [vmem:[#allocation5 + $0x8d8] sm:$0xff]
    %v371 = vld [vmem:[#allocation5 + $0x8e0] sm:$0xff]
    %v372 = vld [vmem:[#allocation5 + $0x8e8] sm:$0xff]
    %v373 = vld [vmem:[#allocation5 + $0x8f0] sm:$0xff]
    %v374 = vld [vmem:[#allocation5 + $0x8f8] sm:$0xff]
    %v375 = vld [vmem:[#allocation5 + $0x900] sm:$0xff]
    %v376 = vld [vmem:[#allocation5 + $0x908] sm:$0xff]
    %v377 = vld [vmem:[#allocation5 + $0x910] sm:$0xff]
    %v378 = vld [vmem:[#allocation5 + $0x918] sm:$0xff]
    %v379 = vld [vmem:[#allocation5 + $0x920] sm:$0xff]
    %v380 = vld [vmem:[#allocation5 + $0x928] sm:$0xff]
    %v381 = vld [vmem:[#allocation5 + $0x930] sm:$0xff]
    %v382 = vld [vmem:[#allocation5 + $0x938] sm:$0xff]
    %v383 = vld [vmem:[#allocation5 + $0x940] sm:$0xff]
    %v384 = vld [vmem:[#allocation5 + $0x948] sm:$0xff]
    %v385 = vld [vmem:[#allocation5 + $0x950] sm:$0xff]
    %v386 = vld [vmem:[#allocation5 + $0x958] sm:$0xff]
    %v387 = vld [vmem:[#allocation5 + $0x960] sm:$0xff]
    %v388 = vld [vmem:[#allocation5 + $0x968] sm:$0xff]
    %v389 = vld [vmem:[#allocation5 + $0x970] sm:$0xff]
    %v390 = vld [vmem:[#allocation5 + $0x978] sm:$0xff]
    %v391 = vld [vmem:[#allocation5 + $0x980] sm:$0xff]
    %v392 = vld [vmem:[#allocation5 + $0x988] sm:$0xff]
    %v393 = vld [vmem:[#allocation5 + $0x990] sm:$0xff]
    %v394 = vld [vmem:[#allocation5 + $0x998] sm:$0xff]
    %v395 = vld [vmem:[#allocation5 + $0x9a0] sm:$0xff]
    %v396 = vld [vmem:[#allocation5 + $0x9a8] sm:$0xff]
    %v397 = vld [vmem:[#allocation5 + $0x9b0] sm:$0xff]
    %v398 = vld [vmem:[#allocation5 + $0x9b8] sm:$0xff]
    %v399 = vld [vmem:[#allocation5 + $0x9c0] sm:$0xff]
    %v400 = vld [vmem:[#allocation5 + $0x9c8] sm:$0xff]
    %v401 = vld [vmem:[#allocation5 + $0x9d0] sm:$0xff]
    %v402 = vld [vmem:[#allocation5 + $0x9d8] sm:$0xff]
    %v403 = vld [vmem:[#allocation5 + $0x9e0] sm:$0xff]
    %v404 = vld [vmem:[#allocation5 + $0x9e8] sm:$0xff]
    %v405 = vld [vmem:[#allocation5 + $0x9f0] sm:$0xff]
    %v406 = vld [vmem:[#allocation5 + $0x9f8] sm:$0xff]
    %v407 = vld [vmem:[#allocation5 + $0xa00] sm:$0xff]
    %v408 = vld [vmem:[#allocation5 + $0xa08] sm:$0xff]
    %v409 = vld [vmem:[#allocation5 + $0xa10] sm:$0xff]
    %v410 = vld [vmem:[#allocation5 + $0xa18] sm:$0xff]
    %v411 = vld [vmem:[#allocation5 + $0xa20] sm:$0xff]
    %v412 = vld [vmem:[#allocation5 + $0xa28] sm:$0xff]
    %v413 = vld [vmem:[#allocation5 + $0xa30] sm:$0xff]
    %v414 = vld [vmem:[#allocation5 + $0xa38] sm:$0xff]
    %v415 = vld [vmem:[#allocation5 + $0xa40] sm:$0xff]
    %v416 = vld [vmem:[#allocation5 + $0xa48] sm:$0xff]
    %v417 = vld [vmem:[#allocation5 + $0xa50] sm:$0xff]
    %v418 = vld [vmem:[#allocation5 + $0xa58] sm:$0xff]
    %v419 = vld [vmem:[#allocation5 + $0xa60] sm:$0xff]
    %v420 = vld [vmem:[#allocation5 + $0xa68] sm:$0xff]
    %v421 = vld [vmem:[#allocation5 + $0xa70] sm:$0xff]
    %v422 = vld [vmem:[#allocation5 + $0xa78] sm:$0xff]
    %v423 = vld [vmem:[#allocation5 + $0xa80] sm:$0xff]
    %v424 = vld [vmem:[#allocation5 + $0xa88] sm:$0xff]
    %v425 = vld [vmem:[#allocation5 + $0xa90] sm:$0xff]
    %v426 = vld [vmem:[#allocation5 + $0xa98] sm:$0xff]
    %v427 = vld [vmem:[#allocation5 + $0xaa0] sm:$0xff]
    %v428 = vld [vmem:[#allocation5 + $0xaa8] sm:$0xff]
    %v429 = vld [vmem:[#allocation5 + $0xab0] sm:$0xff]
    %v430 = vld [vmem:[#allocation5 + $0xab8] sm:$0xff]
    %v431 = vld [vmem:[#allocation5 + $0xac0] sm:$0xff]
    %v432 = vld [vmem:[#allocation5 + $0xac8] sm:$0xff]
    %v433 = vld [vmem:[#allocation5 + $0xad0] sm:$0xff]
    %v434 = vld [vmem:[#allocation5 + $0xad8] sm:$0xff]
    %v435 = vld [vmem:[#allocation5 + $0xae0] sm:$0xff]
    %v436 = vld [vmem:[#allocation5 + $0xae8] sm:$0xff]
    %v437 = vld [vmem:[#allocation5 + $0xaf0] sm:$0xff]
    %v438 = vld [vmem:[#allocation5 + $0xaf8] sm:$0xff]
    %v439 = vld [vmem:[#allocation5 + $0xb00] sm:$0xff]
    %v440 = vld [vmem:[#allocation5 + $0xb08] sm:$0xff]
    %v441 = vld [vmem:[#allocation5 + $0xb10] sm:$0xff]
    %v442 = vld [vmem:[#allocation5 + $0xb18] sm:$0xff]
    %v443 = vld [vmem:[#allocation5 + $0xb20] sm:$0xff]
    %v444 = vld [vmem:[#allocation5 + $0xb28] sm:$0xff]
    %v445 = vld [vmem:[#allocation5 + $0xb30] sm:$0xff]
    %v446 = vld [vmem:[#allocation5 + $0xb38] sm:$0xff]
    %v447 = vld [vmem:[#allocation5 + $0xb40] sm:$0xff]
    %v448 = vld [vmem:[#allocation5 + $0xb48] sm:$0xff]
    %v449 = vld [vmem:[#allocation5 + $0xb50] sm:$0xff]
    %v450 = vld [vmem:[#allocation5 + $0xb58] sm:$0xff]
    %v451 = vld [vmem:[#allocation5 + $0xb60] sm:$0xff]
    %v452 = vld [vmem:[#allocation5 + $0xb68] sm:$0xff]
    %v453 = vld [vmem:[#allocation5 + $0xb70] sm:$0xff]
    %v454 = vld [vmem:[#allocation5 + $0xb78] sm:$0xff]
    %v455 = vld [vmem:[#allocation5 + $0xb80] sm:$0xff]
    %v456 = vld [vmem:[#allocation5 + $0xb88] sm:$0xff]
    %v457 = vld [vmem:[#allocation5 + $0xb90] sm:$0xff]
    %v458 = vld [vmem:[#allocation5 + $0xb98] sm:$0xff]
    %v459 = vld [vmem:[#allocation5 + $0xba0] sm:$0xff]
    %v460 = vld [vmem:[#allocation5 + $0xba8] sm:$0xff]
    %v461 = vld [vmem:[#allocation5 + $0xbb0] sm:$0xff]
    %v462 = vld [vmem:[#allocation5 + $0xbb8] sm:$0xff]
    %v463 = vld [vmem:[#allocation5 + $0xbc0] sm:$0xff]
    %v464 = vld [vmem:[#allocation5 + $0xbc8] sm:$0xff]
    %v465 = vld [vmem:[#allocation5 + $0xbd0] sm:$0xff]
    %v466 = vld [vmem:[#allocation5 + $0xbd8] sm:$0xff]
    %v467 = vld [vmem:[#allocation5 + $0xbe0] sm:$0xff]
    %v468 = vld [vmem:[#allocation5 + $0xbe8] sm:$0xff]
    %v469 = vld [vmem:[#allocation5 + $0xbf0] sm:$0xff]
    %v470 = vld [vmem:[#allocation5 + $0xbf8] sm:$0xff]
    %v471 = vld [vmem:[#allocation5 + $0xc00] sm:$0xff]
    %v472 = vld [vmem:[#allocation5 + $0xc08] sm:$0xff]
    %v473 = vld [vmem:[#allocation5 + $0xc10] sm:$0xff]
    %v474 = vld [vmem:[#allocation5 + $0xc18] sm:$0xff]
    %v475 = vld [vmem:[#allocation5 + $0xc20] sm:$0xff]
    %v476 = vld [vmem:[#allocation5 + $0xc28] sm:$0xff]
    %v477 = vld [vmem:[#allocation5 + $0xc30] sm:$0xff]
    %v478 = vld [vmem:[#allocation5 + $0xc38] sm:$0xff]
    %v479 = vld [vmem:[#allocation5 + $0xc40] sm:$0xff]
    %v480 = vld [vmem:[#allocation5 + $0xc48] sm:$0xff]
    %v481 = vld [vmem:[#allocation5 + $0xc50] sm:$0xff]
    %v482 = vld [vmem:[#allocation5 + $0xc58] sm:$0xff]
    %v483 = vld [vmem:[#allocation5 + $0xc60] sm:$0xff]
    %v484 = vld [vmem:[#allocation5 + $0xc68] sm:$0xff]
    %v485 = vld [vmem:[#allocation5 + $0xc70] sm:$0xff]
    %v486 = vld [vmem:[#allocation5 + $0xc78] sm:$0xff]
    %v487 = vld [vmem:[#allocation5 + $0xc80] sm:$0xff]
    %v488 = vld [vmem:[#allocation5 + $0xc88] sm:$0xff]
    %v489 = vld [vmem:[#allocation5 + $0xc90] sm:$0xff]
    %v490 = vld [vmem:[#allocation5 + $0xc98] sm:$0xff]
    %v491 = vld [vmem:[#allocation5 + $0xca0] sm:$0xff]
    %v492 = vld [vmem:[#allocation5 + $0xca8] sm:$0xff]
    %v493 = vld [vmem:[#allocation5 + $0xcb0] sm:$0xff]
    %v494 = vld [vmem:[#allocation5 + $0xcb8] sm:$0xff]
    %v495 = vld [vmem:[#allocation5 + $0xcc0] sm:$0xff]
    %v496 = vld [vmem:[#allocation5 + $0xcc8] sm:$0xff]
    %v497 = vld [vmem:[#allocation5 + $0xcd0] sm:$0xff]
    %v498 = vld [vmem:[#allocation5 + $0xcd8] sm:$0xff]
    %v499 = vld [vmem:[#allocation5 + $0xce0] sm:$0xff]
    %v500 = vld [vmem:[#allocation5 + $0xce8] sm:$0xff]
    %v501 = vld [vmem:[#allocation5 + $0xcf0] sm:$0xff]
    %v502 = vld [vmem:[#allocation5 + $0xcf8] sm:$0xff]
    %v503 = vld [vmem:[#allocation5 + $0xd00] sm:$0xff]
    %v504 = vld [vmem:[#allocation5 + $0xd08] sm:$0xff]
    %v505 = vld [vmem:[#allocation5 + $0xd10] sm:$0xff]
    %v506 = vld [vmem:[#allocation5 + $0xd18] sm:$0xff]
    %v507 = vld [vmem:[#allocation5 + $0xd20] sm:$0xff]
    %v508 = vld [vmem:[#allocation5 + $0xd28] sm:$0xff]
    %v509 = vld [vmem:[#allocation5 + $0xd30] sm:$0xff]
    %v510 = vld [vmem:[#allocation5 + $0xd38] sm:$0xff]
    %v511 = vld [vmem:[#allocation5 + $0xd40] sm:$0xff]
    %v512 = vld [vmem:[#allocation5 + $0xd48] sm:$0xff]
    %v513 = vld [vmem:[#allocation5 + $0xd50] sm:$0xff]
    %v514 = vld [vmem:[#allocation5 + $0xd58] sm:$0xff]
    %v515 = vld [vmem:[#allocation5 + $0xd60] sm:$0xff]
    %v516 = vld [vmem:[#allocation5 + $0xd68] sm:$0xff]
    %v517 = vld [vmem:[#allocation5 + $0xd70] sm:$0xff]
    %v518 = vld [vmem:[#allocation5 + $0xd78] sm:$0xff]
    %v519 = vld [vmem:[#allocation5 + $0xd80] sm:$0xff]
    %v520 = vld [vmem:[#allocation5 + $0xd88] sm:$0xff]
    %v521 = vld [vmem:[#allocation5 + $0xd90] sm:$0xff]
    %v522 = vld [vmem:[#allocation5 + $0xd98] sm:$0xff]
    %v523 = vld [vmem:[#allocation5 + $0xda0] sm:$0xff]
    %v524 = vld [vmem:[#allocation5 + $0xda8] sm:$0xff]
    %v525 = vld [vmem:[#allocation5 + $0xdb0] sm:$0xff]
    %v526 = vld [vmem:[#allocation5 + $0xdb8] sm:$0xff]
    %v527 = vld [vmem:[#allocation5 + $0xdc0] sm:$0xff]
    %v528 = vld [vmem:[#allocation5 + $0xdc8] sm:$0xff]
    %v529 = vld [vmem:[#allocation5 + $0xdd0] sm:$0xff]
    %v530 = vld [vmem:[#allocation5 + $0xdd8] sm:$0xff]
    %v531 = vld [vmem:[#allocation5 + $0xde0] sm:$0xff]
    %v532 = vld [vmem:[#allocation5 + $0xde8] sm:$0xff]
    %v533 = vld [vmem:[#allocation5 + $0xdf0] sm:$0xff]
    %v534 = vld [vmem:[#allocation5 + $0xdf8] sm:$0xff]
    %v535 = vld [vmem:[#allocation5 + $0xe00] sm:$0xff]
    %v536 = vld [vmem:[#allocation5 + $0xe08] sm:$0xff]
    %v537 = vld [vmem:[#allocation5 + $0xe10] sm:$0xff]
    %v538 = vld [vmem:[#allocation5 + $0xe18] sm:$0xff]
    %v539 = vld [vmem:[#allocation5 + $0xe20] sm:$0xff]
    %v540 = vld [vmem:[#allocation5 + $0xe28] sm:$0xff]
    %v541 = vld [vmem:[#allocation5 + $0xe30] sm:$0xff]
    %v542 = vld [vmem:[#allocation5 + $0xe38] sm:$0xff]
    %v543 = vld [vmem:[#allocation5 + $0xe40] sm:$0xff]
    %v544 = vld [vmem:[#allocation5 + $0xe48] sm:$0xff]
    %v545 = vld [vmem:[#allocation5 + $0xe50] sm:$0xff]
    %v546 = vld [vmem:[#allocation5 + $0xe58] sm:$0xff]
    %v547 = vld [vmem:[#allocation5 + $0xe60] sm:$0xff]
    %v548 = vld [vmem:[#allocation5 + $0xe68] sm:$0xff]
    %v549 = vld [vmem:[#allocation5 + $0xe70] sm:$0xff]
    %v550 = vld [vmem:[#allocation5 + $0xe78] sm:$0xff]
    %v551 = vld [vmem:[#allocation5 + $0xe80] sm:$0xff]
    %v552 = vld [vmem:[#allocation5 + $0xe88] sm:$0xff]
    %v553 = vld [vmem:[#allocation5 + $0xe90] sm:$0xff]
    %v554 = vld [vmem:[#allocation5 + $0xe98] sm:$0xff]
    %v555 = vld [vmem:[#allocation5 + $0xea0] sm:$0xff]
    %v556 = vld [vmem:[#allocation5 + $0xea8] sm:$0xff]
    %v557 = vld [vmem:[#allocation5 + $0xeb0] sm:$0xff]
    %v558 = vld [vmem:[#allocation5 + $0xeb8] sm:$0xff]
    %v559 = vld [vmem:[#allocation5 + $0xec0] sm:$0xff]
    %v560 = vld [vmem:[#allocation5 + $0xec8] sm:$0xff]
    %v561 = vld [vmem:[#allocation5 + $0xed0] sm:$0xff]
    %v562 = vld [vmem:[#allocation5 + $0xed8] sm:$0xff]
    %v563 = vld [vmem:[#allocation5 + $0xee0] sm:$0xff]
    %v564 = vld [vmem:[#allocation5 + $0xee8] sm:$0xff]
    %v565 = vld [vmem:[#allocation5 + $0xef0] sm:$0xff]
    %v566 = vld [vmem:[#allocation5 + $0xef8] sm:$0xff]
    %v567 = vld [vmem:[#allocation5 + $0xf00] sm:$0xff]
    %v568 = vld [vmem:[#allocation5 + $0xf08] sm:$0xff]
    %v569 = vld [vmem:[#allocation5 + $0xf10] sm:$0xff]
    %v570 = vld [vmem:[#allocation5 + $0xf18] sm:$0xff]
    %v571 = vld [vmem:[#allocation5 + $0xf20] sm:$0xff]
    %v572 = vld [vmem:[#allocation5 + $0xf28] sm:$0xff]
    %v573 = vld [vmem:[#allocation5 + $0xf30] sm:$0xff]
    %v574 = vld [vmem:[#allocation5 + $0xf38] sm:$0xff]
    %v575 = vld [vmem:[#allocation5 + $0xf40] sm:$0xff]
    %v576 = vld [vmem:[#allocation5 + $0xf48] sm:$0xff]
    %v577 = vld [vmem:[#allocation5 + $0xf50] sm:$0xff]
    %v578 = vld [vmem:[#allocation5 + $0xf58] sm:$0xff]
    %v579 = vld [vmem:[#allocation5 + $0xf60] sm:$0xff]
    %v580 = vld [vmem:[#allocation5 + $0xf68] sm:$0xff]
    %v581 = vld [vmem:[#allocation5 + $0xf70] sm:$0xff]
    %v582 = vld [vmem:[#allocation5 + $0xf78] sm:$0xff]
    %v583 = vld [vmem:[#allocation5 + $0xf80] sm:$0xff]
    %v584 = vld [vmem:[#allocation5 + $0xf88] sm:$0xff]
    %v585 = vld [vmem:[#allocation5 + $0xf90] sm:$0xff]
    %v586 = vld [vmem:[#allocation5 + $0xf98] sm:$0xff]
    %v587 = vld [vmem:[#allocation5 + $0xfa0] sm:$0xff]
    %v588 = vld [vmem:[#allocation5 + $0xfa8] sm:$0xff]
    %v589 = vld [vmem:[#allocation5 + $0xfb0] sm:$0xff]
    %v590 = vld [vmem:[#allocation5 + $0xfb8] sm:$0xff]
    %v591 = vld [vmem:[#allocation5 + $0xfc0] sm:$0xff]
    %v592 = vld [vmem:[#allocation5 + $0xfc8] sm:$0xff]
    %v593 = vld [vmem:[#allocation5 + $0xfd0] sm:$0xff]
    %v594 = vld [vmem:[#allocation5 + $0xfd8] sm:$0xff]
    %v595 = vld [vmem:[#allocation5 + $0xfe0] sm:$0xff]
    %v596 = vld [vmem:[#allocation5 + $0xfe8] sm:$0xff]
    %v597 = vld [vmem:[#allocation5 + $0xff0] sm:$0xff]
    %v598 = vld [vmem:[#allocation5 + $0xff8] sm:$0xff]
    %v599 = vld [vmem:[#allocation7] sm:$0xff]
    %v601 = vlaneseq
    %v602 = vshrl.u32 %v601, 7
    %v603 = vsub.s32 0, %v602
    %v604 = vrot.slane %v599, %v603
    %v605 = vlaneseq
    %v606 = vshrl.u32 %v605, 7
    %v607 = vsub.s32 1, %v606
    %v608 = vrot.slane %v599, %v607
    %v609 = vlaneseq
    %v610 = vshrl.u32 %v609, 7
    %v611 = vsub.s32 2, %v610
    %v612 = vrot.slane %v599, %v611
    %v613 = vlaneseq
    %v614 = vshrl.u32 %v613, 7
    %v615 = vsub.s32 3, %v614
    %v616 = vrot.slane %v599, %v615
    %v617 = vlaneseq
    %v618 = vshrl.u32 %v617, 7
    %v619 = vsub.s32 4, %v618
    %v620 = vrot.slane %v599, %v619
    %v621 = vlaneseq
    %v622 = vshrl.u32 %v621, 7
    %v623 = vsub.s32 5, %v622
    %v624 = vrot.slane %v599, %v623
    %v625 = vlaneseq
    %v626 = vshrl.u32 %v625, 7
    %v627 = vsub.s32 6, %v626
    %v628 = vrot.slane %v599, %v627
    %v629 = vlaneseq
    %v630 = vshrl.u32 %v629, 7
    %v631 = vsub.s32 7, %v630
    %v632 = vrot.slane %v599, %v631
    %641 = vmatprep.subr.mxu0 %v88
    %642 = vmatpush1.msra.mxu0 %v87
    %643 = vmatprep.subr.mxu0 %v96
    %644 = vmatpush1.msra.mxu0 %v95
    %645 = vmatprep.subr.mxu0 %v104
    %646 = vmatpush1.msra.mxu0 %v103
    %647 = vmatprep.subr.mxu0 %v112
    %648 = vmatpush1.msra.mxu0 %v111
    %649 = vmatprep.subr.mxu0 %v120
    %650 = vmatpush1.msra.mxu0 %v119
    %651 = vmatprep.subr.mxu0 %v128
    %652 = vmatpush1.msra.mxu0 %v127
    %653 = vmatprep.subr.mxu0 %v136
    %654 = vmatpush1.msra.mxu0 %v135
    %655 = vmatprep.subr.mxu0 %v144
    %656 = vmatpush1.msra.mxu0 %v143
    %657 = vmatprep.subr.mxu0 %v152
    %658 = vmatpush1.msra.mxu0 %v151
    %659 = vmatprep.subr.mxu0 %v160
    %660 = vmatpush1.msra.mxu0 %v159
    %661 = vmatprep.subr.mxu0 %v168
    %662 = vmatpush1.msra.mxu0 %v167
    %663 = vmatprep.subr.mxu0 %v176
    %664 = vmatpush1.msra.mxu0 %v175
    %665 = vmatprep.subr.mxu0 %v184
    %666 = vmatpush1.msra.mxu0 %v183
    %667 = vmatprep.subr.mxu0 %v192
    %668 = vmatpush1.msra.mxu0 %v191
    %669 = vmatprep.subr.mxu0 %v200
    %670 = vmatpush1.msra.mxu0 %v199
    %671 = vmatprep.subr.mxu0 %v208
    %672 = vmatpush1.msra.mxu0 %v207
    %673 = vmatprep.subr.mxu0 %v216
    %674 = vmatpush1.msra.mxu0 %v215
    %675 = vmatprep.subr.mxu0 %v224
    %676 = vmatpush1.msra.mxu0 %v223
    %677 = vmatprep.subr.mxu0 %v232
    %678 = vmatpush1.msra.mxu0 %v231
    %679 = vmatprep.subr.mxu0 %v240
    %680 = vmatpush1.msra.mxu0 %v239
    %681 = vmatprep.subr.mxu0 %v248
    %682 = vmatpush1.msra.mxu0 %v247
    %683 = vmatprep.subr.mxu0 %v256
    %684 = vmatpush1.msra.mxu0 %v255
    %685 = vmatprep.subr.mxu0 %v264
    %686 = vmatpush1.msra.mxu0 %v263
    %687 = vmatprep.subr.mxu0 %v272
    %688 = vmatpush1.msra.mxu0 %v271
    %689 = vmatprep.subr.mxu0 %v280
    %690 = vmatpush1.msra.mxu0 %v279
    %691 = vmatprep.subr.mxu0 %v288
    %692 = vmatpush1.msra.mxu0 %v287
    %693 = vmatprep.subr.mxu0 %v296
    %694 = vmatpush1.msra.mxu0 %v295
    %695 = vmatprep.subr.mxu0 %v304
    %696 = vmatpush1.msra.mxu0 %v303
    %697 = vmatprep.subr.mxu0 %v312
    %698 = vmatpush1.msra.mxu0 %v311
    %699 = vmatprep.subr.mxu0 %v320
    %700 = vmatpush1.msra.mxu0 %v319
    %701 = vmatprep.subr.mxu0 %v328
    %702 = vmatpush1.msra.mxu0 %v327
    %703 = vmatprep.subr.mxu0 %v336
    %704 = vmatpush1.msra.mxu0 %v335
    %705 = vmatprep.mubr.f32.mxu0 %v84
    %706 = vmatmul.mubr.f32.gmra.mrb[0].mxu0 %v83
    %v707 = vpop.f32.mrb[0].mxu0
    %v708 = vadd.f32 %v604, %v707
    %v709 = vpop.f32.mrb[0].mxu0
    %v710 = vadd.f32 %v608, %v709
    %711 = vdwg.mxu0
    %712 = vmatprep.subr.mxu0 %v344
    %713 = vmatpush1.msra.mxu0 %v343
    %714 = vmatprep.subr.mxu0 %v352
    %715 = vmatpush1.msra.mxu0 %v351
    %716 = vmatprep.subr.mxu0 %v360
    %717 = vmatpush1.msra.mxu0 %v359
    %718 = vmatprep.subr.mxu0 %v368
    %719 = vmatpush1.msra.mxu0 %v367
    %720 = vmatprep.subr.mxu0 %v376
    %721 = vmatpush1.msra.mxu0 %v375
    %722 = vmatprep.subr.mxu0 %v384
    %723 = vmatpush1.msra.mxu0 %v383
    %724 = vmatprep.subr.mxu0 %v392
    %725 = vmatpush1.msra.mxu0 %v391
    %726 = vmatprep.subr.mxu0 %v400
    %727 = vmatpush1.msra.mxu0 %v399
    %728 = vmatprep.subr.mxu0 %v408
    %729 = vmatpush1.msra.mxu0 %v407
    %730 = vmatprep.subr.mxu0 %v416
    %731 = vmatpush1.msra.mxu0 %v415
    %732 = vmatprep.subr.mxu0 %v424
    %733 = vmatpush1.msra.mxu0 %v423
    %734 = vmatprep.subr.mxu0 %v432
    %735 = vmatpush1.msra.mxu0 %v431
    %736 = vmatprep.subr.mxu0 %v440
    %737 = vmatpush1.msra.mxu0 %v439
    %738 = vmatprep.subr.mxu0 %v448
    %739 = vmatpush1.msra.mxu0 %v447
    %740 = vmatprep.subr.mxu0 %v456
    %741 = vmatpush1.msra.mxu0 %v455
    %742 = vmatprep.subr.mxu0 %v464
    %743 = vmatpush1.msra.mxu0 %v463
    %744 = vmatprep.subr.mxu0 %v472
    %745 = vmatpush1.msra.mxu0 %v471
    %746 = vmatprep.subr.mxu0 %v480
    %747 = vmatpush1.msra.mxu0 %v479
    %748 = vmatprep.subr.mxu0 %v488
    %749 = vmatpush1.msra.mxu0 %v487
    %750 = vmatprep.subr.mxu0 %v496
    %751 = vmatpush1.msra.mxu0 %v495
    %752 = vmatprep.subr.mxu0 %v504
    %753 = vmatpush1.msra.mxu0 %v503
    %754 = vmatprep.subr.mxu0 %v512
    %755 = vmatpush1.msra.mxu0 %v511
    %756 = vmatprep.subr.mxu0 %v520
    %757 = vmatpush1.msra.mxu0 %v519
    %758 = vmatprep.subr.mxu0 %v528
    %759 = vmatpush1.msra.mxu0 %v527
    %760 = vmatprep.subr.mxu0 %v536
    %761 = vmatpush1.msra.mxu0 %v535
    %762 = vmatprep.subr.mxu0 %v544
    %763 = vmatpush1.msra.mxu0 %v543
    %764 = vmatprep.subr.mxu0 %v552
    %765 = vmatpush1.msra.mxu0 %v551
    %766 = vmatprep.subr.mxu0 %v560
    %767 = vmatpush1.msra.mxu0 %v559
    %768 = vmatprep.subr.mxu0 %v568
    %769 = vmatpush1.msra.mxu0 %v567
    %770 = vmatprep.subr.mxu0 %v576
    %771 = vmatpush1.msra.mxu0 %v575
    %772 = vmatprep.subr.mxu0 %v584
    %773 = vmatpush1.msra.mxu0 %v583
    %774 = vmatprep.subr.mxu0 %v592
    %775 = vmatpush1.msra.mxu0 %v591
    %776 = vmatprep.mubr.f32.mxu0 %v86
    %777 = vmatmul.mubr.f32.gmra.mrb[0].mxu0 %v85
    %v778 = vpop.f32.mrb[0].mxu0
    %v779 = vadd.f32 %v708, %v778
    %v780 = vpop.f32.mrb[0].mxu0
    %v781 = vadd.f32 %v710, %v780
    %782 = vdwg.mxu0
    %783 = vmatprep.subr.mxu0 %v90
    %784 = vmatpush1.msra.mxu0 %v89
    %785 = vmatprep.subr.mxu0 %v98
    %786 = vmatpush1.msra.mxu0 %v97
    %787 = vmatprep.subr.mxu0 %v106
    %788 = vmatpush1.msra.mxu0 %v105
    %789 = vmatprep.subr.mxu0 %v114
    %790 = vmatpush1.msra.mxu0 %v113
    %791 = vmatprep.subr.mxu0 %v122
    %792 = vmatpush1.msra.mxu0 %v121
    %793 = vmatprep.subr.mxu0 %v130
    %794 = vmatpush1.msra.mxu0 %v129
    %795 = vmatprep.subr.mxu0 %v138
    %796 = vmatpush1.msra.mxu0 %v137
    %797 = vmatprep.subr.mxu0 %v146
    %798 = vmatpush1.msra.mxu0 %v145
    %799 = vmatprep.subr.mxu0 %v154
    %800 = vmatpush1.msra.mxu0 %v153
    %801 = vmatprep.subr.mxu0 %v162
    %802 = vmatpush1.msra.mxu0 %v161
    %803 = vmatprep.subr.mxu0 %v170
    %804 = vmatpush1.msra.mxu0 %v169
    %805 = vmatprep.subr.mxu0 %v178
    %806 = vmatpush1.msra.mxu0 %v177
    %807 = vmatprep.subr.mxu0 %v186
    %808 = vmatpush1.msra.mxu0 %v185
    %809 = vmatprep.subr.mxu0 %v194
    %810 = vmatpush1.msra.mxu0 %v193
    %811 = vmatprep.subr.mxu0 %v202
    %812 = vmatpush1.msra.mxu0 %v201
    %813 = vmatprep.subr.mxu0 %v210
    %814 = vmatpush1.msra.mxu0 %v209
    %815 = vmatprep.subr.mxu0 %v218
    %816 = vmatpush1.msra.mxu0 %v217
    %817 = vmatprep.subr.mxu0 %v226
    %818 = vmatpush1.msra.mxu0 %v225
    %819 = vmatprep.subr.mxu0 %v234
    %820 = vmatpush1.msra.mxu0 %v233
    %821 = vmatprep.subr.mxu0 %v242
    %822 = vmatpush1.msra.mxu0 %v241
    %823 = vmatprep.subr.mxu0 %v250
    %824 = vmatpush1.msra.mxu0 %v249
    %825 = vmatprep.subr.mxu0 %v258
    %826 = vmatpush1.msra.mxu0 %v257
    %827 = vmatprep.subr.mxu0 %v266
    %828 = vmatpush1.msra.mxu0 %v265
    %829 = vmatprep.subr.mxu0 %v274
    %830 = vmatpush1.msra.mxu0 %v273
    %831 = vmatprep.subr.mxu0 %v282
    %832 = vmatpush1.msra.mxu0 %v281
    %833 = vmatprep.subr.mxu0 %v290
    %834 = vmatpush1.msra.mxu0 %v289
    %835 = vmatprep.subr.mxu0 %v298
    %836 = vmatpush1.msra.mxu0 %v297
    %837 = vmatprep.subr.mxu0 %v306
    %838 = vmatpush1.msra.mxu0 %v305
    %839 = vmatprep.subr.mxu0 %v314
    %840 = vmatpush1.msra.mxu0 %v313
    %841 = vmatprep.subr.mxu0 %v322
    %842 = vmatpush1.msra.mxu0 %v321
    %843 = vmatprep.subr.mxu0 %v330
    %844 = vmatpush1.msra.mxu0 %v329
    %845 = vmatprep.subr.mxu0 %v338
    %846 = vmatpush1.msra.mxu0 %v337
    %847 = vmatprep.mubr.f32.mxu0 %v84
    %848 = vmatmul.mubr.f32.gmra.mrb[0].mxu0 %v83
    %v849 = vpop.f32.mrb[0].mxu0
    %v850 = vadd.f32 %v612, %v849
    %v851 = vpop.f32.mrb[0].mxu0
    %v852 = vadd.f32 %v616, %v851
    %853 = vdwg.mxu0
    %854 = vmatprep.subr.mxu0 %v346
    %855 = vmatpush1.msra.mxu0 %v345
    %856 = vmatprep.subr.mxu0 %v354
    %857 = vmatpush1.msra.mxu0 %v353
    %858 = vmatprep.subr.mxu0 %v362
    %859 = vmatpush1.msra.mxu0 %v361
    %860 = vmatprep.subr.mxu0 %v370
    %861 = vmatpush1.msra.mxu0 %v369
    %862 = vmatprep.subr.mxu0 %v378
    %863 = vmatpush1.msra.mxu0 %v377
    %864 = vmatprep.subr.mxu0 %v386
    %865 = vmatpush1.msra.mxu0 %v385
    %866 = vmatprep.subr.mxu0 %v394
    %867 = vmatpush1.msra.mxu0 %v393
    %868 = vmatprep.subr.mxu0 %v402
    %869 = vmatpush1.msra.mxu0 %v401
    %870 = vmatprep.subr.mxu0 %v410
    %871 = vmatpush1.msra.mxu0 %v409
    %872 = vmatprep.subr.mxu0 %v418
    %873 = vmatpush1.msra.mxu0 %v417
    %874 = vmatprep.subr.mxu0 %v426
    %875 = vmatpush1.msra.mxu0 %v425
    %876 = vmatprep.subr.mxu0 %v434
    %877 = vmatpush1.msra.mxu0 %v433
    %878 = vmatprep.subr.mxu0 %v442
    %879 = vmatpush1.msra.mxu0 %v441
    %880 = vmatprep.subr.mxu0 %v450
    %881 = vmatpush1.msra.mxu0 %v449
    %882 = vmatprep.subr.mxu0 %v458
    %883 = vmatpush1.msra.mxu0 %v457
    %884 = vmatprep.subr.mxu0 %v466
    %885 = vmatpush1.msra.mxu0 %v465
    %886 = vmatprep.subr.mxu0 %v474
    %887 = vmatpush1.msra.mxu0 %v473
    %888 = vmatprep.subr.mxu0 %v482
    %889 = vmatpush1.msra.mxu0 %v481
    %890 = vmatprep.subr.mxu0 %v490
    %891 = vmatpush1.msra.mxu0 %v489
    %892 = vmatprep.subr.mxu0 %v498
    %893 = vmatpush1.msra.mxu0 %v497
    %894 = vmatprep.subr.mxu0 %v506
    %895 = vmatpush1.msra.mxu0 %v505
    %896 = vmatprep.subr.mxu0 %v514
    %897 = vmatpush1.msra.mxu0 %v513
    %898 = vmatprep.subr.mxu0 %v522
    %899 = vmatpush1.msra.mxu0 %v521
    %900 = vmatprep.subr.mxu0 %v530
    %901 = vmatpush1.msra.mxu0 %v529
    %902 = vmatprep.subr.mxu0 %v538
    %903 = vmatpush1.msra.mxu0 %v537
    %904 = vmatprep.subr.mxu0 %v546
    %905 = vmatpush1.msra.mxu0 %v545
    %906 = vmatprep.subr.mxu0 %v554
    %907 = vmatpush1.msra.mxu0 %v553
    %908 = vmatprep.subr.mxu0 %v562
    %909 = vmatpush1.msra.mxu0 %v561
    %910 = vmatprep.subr.mxu0 %v570
    %911 = vmatpush1.msra.mxu0 %v569
    %912 = vmatprep.subr.mxu0 %v578
    %913 = vmatpush1.msra.mxu0 %v577
    %914 = vmatprep.subr.mxu0 %v586
    %915 = vmatpush1.msra.mxu0 %v585
    %916 = vmatprep.subr.mxu0 %v594
    %917 = vmatpush1.msra.mxu0 %v593
    %918 = vmatprep.mubr.f32.mxu0 %v86
    %919 = vmatmul.mubr.f32.gmra.mrb[0].mxu0 %v85
    %v920 = vpop.f32.mrb[0].mxu0
    %v921 = vadd.f32 %v850, %v920
    %v922 = vpop.f32.mrb[0].mxu0
    %v923 = vadd.f32 %v852, %v922
    %924 = vdwg.mxu0
    %925 = vmatprep.subr.mxu0 %v92
    %926 = vmatpush1.msra.mxu0 %v91
    %927 = vmatprep.subr.mxu0 %v100
    %928 = vmatpush1.msra.mxu0 %v99
    %929 = vmatprep.subr.mxu0 %v108
    %930 = vmatpush1.msra.mxu0 %v107
    %931 = vmatprep.subr.mxu0 %v116
    %932 = vmatpush1.msra.mxu0 %v115
    %933 = vmatprep.subr.mxu0 %v124
    %934 = vmatpush1.msra.mxu0 %v123
    %935 = vmatprep.subr.mxu0 %v132
    %936 = vmatpush1.msra.mxu0 %v131
    %937 = vmatprep.subr.mxu0 %v140
    %938 = vmatpush1.msra.mxu0 %v139
    %939 = vmatprep.subr.mxu0 %v148
    %940 = vmatpush1.msra.mxu0 %v147
    %941 = vmatprep.subr.mxu0 %v156
    %942 = vmatpush1.msra.mxu0 %v155
    %943 = vmatprep.subr.mxu0 %v164
    %944 = vmatpush1.msra.mxu0 %v163
    %945 = vmatprep.subr.mxu0 %v172
    %946 = vmatpush1.msra.mxu0 %v171
    %947 = vmatprep.subr.mxu0 %v180
    %948 = vmatpush1.msra.mxu0 %v179
    %949 = vmatprep.subr.mxu0 %v188
    %950 = vmatpush1.msra.mxu0 %v187
    %951 = vmatprep.subr.mxu0 %v196
    %952 = vmatpush1.msra.mxu0 %v195
    %953 = vmatprep.subr.mxu0 %v204
    %954 = vmatpush1.msra.mxu0 %v203
    %955 = vmatprep.subr.mxu0 %v212
    %956 = vmatpush1.msra.mxu0 %v211
    %957 = vmatprep.subr.mxu0 %v220
    %958 = vmatpush1.msra.mxu0 %v219
    %959 = vmatprep.subr.mxu0 %v228
    %960 = vmatpush1.msra.mxu0 %v227
    %961 = vmatprep.subr.mxu0 %v236
    %962 = vmatpush1.msra.mxu0 %v235
    %963 = vmatprep.subr.mxu0 %v244
    %964 = vmatpush1.msra.mxu0 %v243
    %965 = vmatprep.subr.mxu0 %v252
    %966 = vmatpush1.msra.mxu0 %v251
    %967 = vmatprep.subr.mxu0 %v260
    %968 = vmatpush1.msra.mxu0 %v259
    %969 = vmatprep.subr.mxu0 %v268
    %970 = vmatpush1.msra.mxu0 %v267
    %971 = vmatprep.subr.mxu0 %v276
    %972 = vmatpush1.msra.mxu0 %v275
    %973 = vmatprep.subr.mxu0 %v284
    %974 = vmatpush1.msra.mxu0 %v283
    %975 = vmatprep.subr.mxu0 %v292
    %976 = vmatpush1.msra.mxu0 %v291
    %977 = vmatprep.subr.mxu0 %v300
    %978 = vmatpush1.msra.mxu0 %v299
    %979 = vmatprep.subr.mxu0 %v308
    %980 = vmatpush1.msra.mxu0 %v307
    %981 = vmatprep.subr.mxu0 %v316
    %982 = vmatpush1.msra.mxu0 %v315
    %983 = vmatprep.subr.mxu0 %v324
    %984 = vmatpush1.msra.mxu0 %v323
    %985 = vmatprep.subr.mxu0 %v332
    %986 = vmatpush1.msra.mxu0 %v331
    %987 = vmatprep.subr.mxu0 %v340
    %988 = vmatpush1.msra.mxu0 %v339
    %989 = vmatprep.mubr.f32.mxu0 %v84
    %990 = vmatmul.mubr.f32.gmra.mrb[0].mxu0 %v83
    %v991 = vpop.f32.mrb[0].mxu0
    %v992 = vadd.f32 %v620, %v991
    %v993 = vpop.f32.mrb[0].mxu0
    %v994 = vadd.f32 %v624, %v993
    %995 = vdwg.mxu0
    %996 = vmatprep.subr.mxu0 %v348
    %997 = vmatpush1.msra.mxu0 %v347
    %998 = vmatprep.subr.mxu0 %v356
    %999 = vmatpush1.msra.mxu0 %v355
    %1000 = vmatprep.subr.mxu0 %v364
    %1001 = vmatpush1.msra.mxu0 %v363
    %1002 = vmatprep.subr.mxu0 %v372
    %1003 = vmatpush1.msra.mxu0 %v371
    %1004 = vmatprep.subr.mxu0 %v380
    %1005 = vmatpush1.msra.mxu0 %v379
    %1006 = vmatprep.subr.mxu0 %v388
    %1007 = vmatpush1.msra.mxu0 %v387
    %1008 = vmatprep.subr.mxu0 %v396
    %1009 = vmatpush1.msra.mxu0 %v395
    %1010 = vmatprep.subr.mxu0 %v404
    %1011 = vmatpush1.msra.mxu0 %v403
    %1012 = vmatprep.subr.mxu0 %v412
    %1013 = vmatpush1.msra.mxu0 %v411
    %1014 = vmatprep.subr.mxu0 %v420
    %1015 = vmatpush1.msra.mxu0 %v419
    %1016 = vmatprep.subr.mxu0 %v428
    %1017 = vmatpush1.msra.mxu0 %v427
    %1018 = vmatprep.subr.mxu0 %v436
    %1019 = vmatpush1.msra.mxu0 %v435
    %1020 = vmatprep.subr.mxu0 %v444
    %1021 = vmatpush1.msra.mxu0 %v443
    %1022 = vmatprep.subr.mxu0 %v452
    %1023 = vmatpush1.msra.mxu0 %v451
    %1024 = vmatprep.subr.mxu0 %v460
    %1025 = vmatpush1.msra.mxu0 %v459
    %1026 = vmatprep.subr.mxu0 %v468
    %1027 = vmatpush1.msra.mxu0 %v467
    %1028 = vmatprep.subr.mxu0 %v476
    %1029 = vmatpush1.msra.mxu0 %v475
    %1030 = vmatprep.subr.mxu0 %v484
    %1031 = vmatpush1.msra.mxu0 %v483
    %1032 = vmatprep.subr.mxu0 %v492
    %1033 = vmatpush1.msra.mxu0 %v491
    %1034 = vmatprep.subr.mxu0 %v500
    %1035 = vmatpush1.msra.mxu0 %v499
    %1036 = vmatprep.subr.mxu0 %v508
    %1037 = vmatpush1.msra.mxu0 %v507
    %1038 = vmatprep.subr.mxu0 %v516
    %1039 = vmatpush1.msra.mxu0 %v515
    %1040 = vmatprep.subr.mxu0 %v524
    %1041 = vmatpush1.msra.mxu0 %v523
    %1042 = vmatprep.subr.mxu0 %v532
    %1043 = vmatpush1.msra.mxu0 %v531
    %1044 = vmatprep.subr.mxu0 %v540
    %1045 = vmatpush1.msra.mxu0 %v539
    %1046 = vmatprep.subr.mxu0 %v548
    %1047 = vmatpush1.msra.mxu0 %v547
    %1048 = vmatprep.subr.mxu0 %v556
    %1049 = vmatpush1.msra.mxu0 %v555
    %1050 = vmatprep.subr.mxu0 %v564
    %1051 = vmatpush1.msra.mxu0 %v563
    %1052 = vmatprep.subr.mxu0 %v572
    %1053 = vmatpush1.msra.mxu0 %v571
    %1054 = vmatprep.subr.mxu0 %v580
    %1055 = vmatpush1.msra.mxu0 %v579
    %1056 = vmatprep.subr.mxu0 %v588
    %1057 = vmatpush1.msra.mxu0 %v587
    %1058 = vmatprep.subr.mxu0 %v596
    %1059 = vmatpush1.msra.mxu0 %v595
    %1060 = vmatprep.mubr.f32.mxu0 %v86
    %1061 = vmatmul.mubr.f32.gmra.mrb[0].mxu0 %v85
    %v1062 = vpop.f32.mrb[0].mxu0
    %v1063 = vadd.f32 %v992, %v1062
    %v1064 = vpop.f32.mrb[0].mxu0
    %v1065 = vadd.f32 %v994, %v1064
    %1066 = vdwg.mxu0
    %1067 = vmatprep.subr.mxu0 %v94
    %1068 = vmatpush1.msra.mxu0 %v93
    %1069 = vmatprep.subr.mxu0 %v102
    %1070 = vmatpush1.msra.mxu0 %v101
    %1071 = vmatprep.subr.mxu0 %v110
    %1072 = vmatpush1.msra.mxu0 %v109
    %1073 = vmatprep.subr.mxu0 %v118
    %1074 = vmatpush1.msra.mxu0 %v117
    %1075 = vmatprep.subr.mxu0 %v126
    %1076 = vmatpush1.msra.mxu0 %v125
    %1077 = vmatprep.subr.mxu0 %v134
    %1078 = vmatpush1.msra.mxu0 %v133
    %1079 = vmatprep.subr.mxu0 %v142
    %1080 = vmatpush1.msra.mxu0 %v141
    %1081 = vmatprep.subr.mxu0 %v150
    %1082 = vmatpush1.msra.mxu0 %v149
    %1083 = vmatprep.subr.mxu0 %v158
    %1084 = vmatpush1.msra.mxu0 %v157
    %1085 = vmatprep.subr.mxu0 %v166
    %1086 = vmatpush1.msra.mxu0 %v165
    %1087 = vmatprep.subr.mxu0 %v174
    %1088 = vmatpush1.msra.mxu0 %v173
    %1089 = vmatprep.subr.mxu0 %v182
    %1090 = vmatpush1.msra.mxu0 %v181
    %1091 = vmatprep.subr.mxu0 %v190
    %1092 = vmatpush1.msra.mxu0 %v189
    %1093 = vmatprep.subr.mxu0 %v198
    %1094 = vmatpush1.msra.mxu0 %v197
    %1095 = vmatprep.subr.mxu0 %v206
    %1096 = vmatpush1.msra.mxu0 %v205
    %1097 = vmatprep.subr.mxu0 %v214
    %1098 = vmatpush1.msra.mxu0 %v213
    %1099 = vmatprep.subr.mxu0 %v222
    %1100 = vmatpush1.msra.mxu0 %v221
    %1101 = vmatprep.subr.mxu0 %v230
    %1102 = vmatpush1.msra.mxu0 %v229
    %1103 = vmatprep.subr.mxu0 %v238
    %1104 = vmatpush1.msra.mxu0 %v237
    %1105 = vmatprep.subr.mxu0 %v246
    %1106 = vmatpush1.msra.mxu0 %v245
    %1107 = vmatprep.subr.mxu0 %v254
    %1108 = vmatpush1.msra.mxu0 %v253
    %1109 = vmatprep.subr.mxu0 %v262
    %1110 = vmatpush1.msra.mxu0 %v261
    %1111 = vmatprep.subr.mxu0 %v270
    %1112 = vmatpush1.msra.mxu0 %v269
    %1113 = vmatprep.subr.mxu0 %v278
    %1114 = vmatpush1.msra.mxu0 %v277
    %1115 = vmatprep.subr.mxu0 %v286
    %1116 = vmatpush1.msra.mxu0 %v285
    %1117 = vmatprep.subr.mxu0 %v294
    %1118 = vmatpush1.msra.mxu0 %v293
    %1119 = vmatprep.subr.mxu0 %v302
    %1120 = vmatpush1.msra.mxu0 %v301
    %1121 = vmatprep.subr.mxu0 %v310
    %1122 = vmatpush1.msra.mxu0 %v309
    %1123 = vmatprep.subr.mxu0 %v318
    %1124 = vmatpush1.msra.mxu0 %v317
    %1125 = vmatprep.subr.mxu0 %v326
    %1126 = vmatpush1.msra.mxu0 %v325
    %1127 = vmatprep.subr.mxu0 %v334
    %1128 = vmatpush1.msra.mxu0 %v333
    %1129 = vmatprep.subr.mxu0 %v342
    %1130 = vmatpush1.msra.mxu0 %v341
    %1131 = vmatprep.mubr.f32.mxu0 %v84
    %1132 = vmatmul.mubr.f32.gmra.mrb[0].mxu0 %v83
    %v1133 = vpop.f32.mrb[0].mxu0
    %v1134 = vadd.f32 %v628, %v1133
    %v1135 = vpop.f32.mrb[0].mxu0
    %v1136 = vadd.f32 %v632, %v1135
    %1137 = vdwg.mxu0
    %1138 = vmatprep.subr.mxu0 %v350
    %1139 = vmatpush1.msra.mxu0 %v349
    %1140 = vmatprep.subr.mxu0 %v358
    %1141 = vmatpush1.msra.mxu0 %v357
    %1142 = vmatprep.subr.mxu0 %v366
    %1143 = vmatpush1.msra.mxu0 %v365
    %1144 = vmatprep.subr.mxu0 %v374
    %1145 = vmatpush1.msra.mxu0 %v373
    %1146 = vmatprep.subr.mxu0 %v382
    %1147 = vmatpush1.msra.mxu0 %v381
    %1148 = vmatprep.subr.mxu0 %v390
    %1149 = vmatpush1.msra.mxu0 %v389
    %1150 = vmatprep.subr.mxu0 %v398
    %1151 = vmatpush1.msra.mxu0 %v397
    %1152 = vmatprep.subr.mxu0 %v406
    %1153 = vmatpush1.msra.mxu0 %v405
    %1154 = vmatprep.subr.mxu0 %v414
    %1155 = vmatpush1.msra.mxu0 %v413
    %1156 = vmatprep.subr.mxu0 %v422
    %1157 = vmatpush1.msra.mxu0 %v421
    %1158 = vmatprep.subr.mxu0 %v430
    %1159 = vmatpush1.msra.mxu0 %v429
    %1160 = vmatprep.subr.mxu0 %v438
    %1161 = vmatpush1.msra.mxu0 %v437
    %1162 = vmatprep.subr.mxu0 %v446
    %1163 = vmatpush1.msra.mxu0 %v445
    %1164 = vmatprep.subr.mxu0 %v454
    %1165 = vmatpush1.msra.mxu0 %v453
    %1166 = vmatprep.subr.mxu0 %v462
    %1167 = vmatpush1.msra.mxu0 %v461
    %1168 = vmatprep.subr.mxu0 %v470
    %1169 = vmatpush1.msra.mxu0 %v469
    %1170 = vmatprep.subr.mxu0 %v478
    %1171 = vmatpush1.msra.mxu0 %v477
    %1172 = vmatprep.subr.mxu0 %v486
    %1173 = vmatpush1.msra.mxu0 %v485
    %1174 = vmatprep.subr.mxu0 %v494
    %1175 = vmatpush1.msra.mxu0 %v493
    %1176 = vmatprep.subr.mxu0 %v502
    %1177 = vmatpush1.msra.mxu0 %v501
    %1178 = vmatprep.subr.mxu0 %v510
    %1179 = vmatpush1.msra.mxu0 %v509
    %1180 = vmatprep.subr.mxu0 %v518
    %1181 = vmatpush1.msra.mxu0 %v517
    %1182 = vmatprep.subr.mxu0 %v526
    %1183 = vmatpush1.msra.mxu0 %v525
    %1184 = vmatprep.subr.mxu0 %v534
    %1185 = vmatpush1.msra.mxu0 %v533
    %1186 = vmatprep.subr.mxu0 %v542
    %1187 = vmatpush1.msra.mxu0 %v541
    %1188 = vmatprep.subr.mxu0 %v550
    %1189 = vmatpush1.msra.mxu0 %v549
    %1190 = vmatprep.subr.mxu0 %v558
    %1191 = vmatpush1.msra.mxu0 %v557
    %1192 = vmatprep.subr.mxu0 %v566
    %1193 = vmatpush1.msra.mxu0 %v565
    %1194 = vmatprep.subr.mxu0 %v574
    %1195 = vmatpush1.msra.mxu0 %v573
    %1196 = vmatprep.subr.mxu0 %v582
    %1197 = vmatpush1.msra.mxu0 %v581
    %1198 = vmatprep.subr.mxu0 %v590
    %1199 = vmatpush1.msra.mxu0 %v589
    %1200 = vmatprep.subr.mxu0 %v598
    %1201 = vmatpush1.msra.mxu0 %v597
    %1202 = vmatprep.mubr.f32.mxu0 %v86
    %1203 = vmatmul.mubr.f32.gmra.mrb[0].mxu0 %v85
    %v1204 = vpop.f32.mrb[0].mxu0
    %v1205 = vadd.f32 %v1134, %v1204
    %v1206 = vpop.f32.mrb[0].mxu0
    %v1207 = vadd.f32 %v1136, %v1206
    %1208 = vdwg.mxu0
    %v1209 = vmax.f32 %v779, 0.0
    %v1210 = vmax.f32 %v781, 0.0
    %v1211 = vmax.f32 %v921, 0.0
    %v1212 = vmax.f32 %v923, 0.0
    %v1213 = vmax.f32 %v1063, 0.0
    %v1214 = vmax.f32 %v1065, 0.0
    %v1215 = vmax.f32 %v1205, 0.0
    %v1216 = vmax.f32 %v1207, 0.0
    %v1217 = vld [vmem:[#allocation8] sm:$0xff]
    %v1218 = vld [vmem:[#allocation8 + $0x8] sm:$0xff]
    %v1219 = vld [vmem:[#allocation8 + $0x10] sm:$0xff]
    %v1220 = vld [vmem:[#allocation8 + $0x18] sm:$0xff]
    %v1221 = vld [vmem:[#allocation8 + $0x20] sm:$0xff]
    %v1222 = vld [vmem:[#allocation8 + $0x28] sm:$0xff]
    %v1223 = vld [vmem:[#allocation8 + $0x30] sm:$0xff]
    %v1224 = vld [vmem:[#allocation8 + $0x38] sm:$0xff]
    %v1225 = vld [vmem:[#allocation8 + $0x40] sm:$0xff]
    %v1226 = vld [vmem:[#allocation8 + $0x48] sm:$0xff]
    %v1227 = vld [vmem:[#allocation8 + $0x50] sm:$0xff]
    %v1228 = vld [vmem:[#allocation8 + $0x58] sm:$0xff]
    %v1229 = vld [vmem:[#allocation8 + $0x60] sm:$0xff]
    %v1230 = vld [vmem:[#allocation8 + $0x68] sm:$0xff]
    %v1231 = vld [vmem:[#allocation8 + $0x70] sm:$0xff]
    %v1232 = vld [vmem:[#allocation8 + $0x78] sm:$0xff]
    %v1233 = vld [vmem:[#allocation8 + $0x80] sm:$0xff]
    %v1234 = vld [vmem:[#allocation8 + $0x88] sm:$0xff]
    %v1235 = vld [vmem:[#allocation8 + $0x90] sm:$0xff]
    %v1236 = vld [vmem:[#allocation8 + $0x98] sm:$0xff]
    %v1237 = vld [vmem:[#allocation8 + $0xa0] sm:$0xff]
    %v1238 = vld [vmem:[#allocation8 + $0xa8] sm:$0xff]
    %v1239 = vld [vmem:[#allocation8 + $0xb0] sm:$0xff]
    %v1240 = vld [vmem:[#allocation8 + $0xb8] sm:$0xff]
    %v1241 = vld [vmem:[#allocation8 + $0xc0] sm:$0xff]
    %v1242 = vld [vmem:[#allocation8 + $0xc8] sm:$0xff]
    %v1243 = vld [vmem:[#allocation8 + $0xd0] sm:$0xff]
    %v1244 = vld [vmem:[#allocation8 + $0xd8] sm:$0xff]
    %v1245 = vld [vmem:[#allocation8 + $0xe0] sm:$0xff]
    %v1246 = vld [vmem:[#allocation8 + $0xe8] sm:$0xff]
    %v1247 = vld [vmem:[#allocation8 + $0xf0] sm:$0xff]
    %v1248 = vld [vmem:[#allocation8 + $0xf8] sm:$0xff]
    %v1249 = vld [vmem:[#allocation8 + $0x100] sm:$0xff]
    %v1250 = vld [vmem:[#allocation8 + $0x108] sm:$0xff]
    %v1251 = vld [vmem:[#allocation8 + $0x110] sm:$0xff]
    %v1252 = vld [vmem:[#allocation8 + $0x118] sm:$0xff]
    %v1253 = vld [vmem:[#allocation8 + $0x120] sm:$0xff]
    %v1254 = vld [vmem:[#allocation8 + $0x128] sm:$0xff]
    %v1255 = vld [vmem:[#allocation8 + $0x130] sm:$0xff]
    %v1256 = vld [vmem:[#allocation8 + $0x138] sm:$0xff]
    %v1257 = vld [vmem:[#allocation8 + $0x140] sm:$0xff]
    %v1258 = vld [vmem:[#allocation8 + $0x148] sm:$0xff]
    %v1259 = vld [vmem:[#allocation8 + $0x150] sm:$0xff]
    %v1260 = vld [vmem:[#allocation8 + $0x158] sm:$0xff]
    %v1261 = vld [vmem:[#allocation8 + $0x160] sm:$0xff]
    %v1262 = vld [vmem:[#allocation8 + $0x168] sm:$0xff]
    %v1263 = vld [vmem:[#allocation8 + $0x170] sm:$0xff]
    %v1264 = vld [vmem:[#allocation8 + $0x178] sm:$0xff]
    %v1265 = vld [vmem:[#allocation8 + $0x180] sm:$0xff]
    %v1266 = vld [vmem:[#allocation8 + $0x188] sm:$0xff]
    %v1267 = vld [vmem:[#allocation8 + $0x190] sm:$0xff]
    %v1268 = vld [vmem:[#allocation8 + $0x198] sm:$0xff]
    %v1269 = vld [vmem:[#allocation8 + $0x1a0] sm:$0xff]
    %v1270 = vld [vmem:[#allocation8 + $0x1a8] sm:$0xff]
    %v1271 = vld [vmem:[#allocation8 + $0x1b0] sm:$0xff]
    %v1272 = vld [vmem:[#allocation8 + $0x1b8] sm:$0xff]
    %v1273 = vld [vmem:[#allocation8 + $0x1c0] sm:$0xff]
    %v1274 = vld [vmem:[#allocation8 + $0x1c8] sm:$0xff]
    %v1275 = vld [vmem:[#allocation8 + $0x1d0] sm:$0xff]
    %v1276 = vld [vmem:[#allocation8 + $0x1d8] sm:$0xff]
    %v1277 = vld [vmem:[#allocation8 + $0x1e0] sm:$0xff]
    %v1278 = vld [vmem:[#allocation8 + $0x1e8] sm:$0xff]
    %v1279 = vld [vmem:[#allocation8 + $0x1f0] sm:$0xff]
    %v1280 = vld [vmem:[#allocation8 + $0x1f8] sm:$0xff]
    %v1281 = vld [vmem:[#allocation8 + $0x200] sm:$0xff]
    %v1282 = vld [vmem:[#allocation8 + $0x208] sm:$0xff]
    %v1283 = vld [vmem:[#allocation8 + $0x210] sm:$0xff]
    %v1284 = vld [vmem:[#allocation8 + $0x218] sm:$0xff]
    %v1285 = vld [vmem:[#allocation8 + $0x220] sm:$0xff]
    %v1286 = vld [vmem:[#allocation8 + $0x228] sm:$0xff]
    %v1287 = vld [vmem:[#allocation8 + $0x230] sm:$0xff]
    %v1288 = vld [vmem:[#allocation8 + $0x238] sm:$0xff]
    %v1289 = vld [vmem:[#allocation8 + $0x240] sm:$0xff]
    %v1290 = vld [vmem:[#allocation8 + $0x248] sm:$0xff]
    %v1291 = vld [vmem:[#allocation8 + $0x250] sm:$0xff]
    %v1292 = vld [vmem:[#allocation8 + $0x258] sm:$0xff]
    %v1293 = vld [vmem:[#allocation8 + $0x260] sm:$0xff]
    %v1294 = vld [vmem:[#allocation8 + $0x268] sm:$0xff]
    %v1295 = vld [vmem:[#allocation8 + $0x270] sm:$0xff]
    %v1296 = vld [vmem:[#allocation8 + $0x278] sm:$0xff]
    %v1297 = vld [vmem:[#allocation8 + $0x280] sm:$0xff]
    %v1298 = vld [vmem:[#allocation8 + $0x288] sm:$0xff]
    %v1299 = vld [vmem:[#allocation8 + $0x290] sm:$0xff]
    %v1300 = vld [vmem:[#allocation8 + $0x298] sm:$0xff]
    %v1301 = vld [vmem:[#allocation8 + $0x2a0] sm:$0xff]
    %v1302 = vld [vmem:[#allocation8 + $0x2a8] sm:$0xff]
    %v1303 = vld [vmem:[#allocation8 + $0x2b0] sm:$0xff]
    %v1304 = vld [vmem:[#allocation8 + $0x2b8] sm:$0xff]
    %v1305 = vld [vmem:[#allocation8 + $0x2c0] sm:$0xff]
    %v1306 = vld [vmem:[#allocation8 + $0x2c8] sm:$0xff]
    %v1307 = vld [vmem:[#allocation8 + $0x2d0] sm:$0xff]
    %v1308 = vld [vmem:[#allocation8 + $0x2d8] sm:$0xff]
    %v1309 = vld [vmem:[#allocation8 + $0x2e0] sm:$0xff]
    %v1310 = vld [vmem:[#allocation8 + $0x2e8] sm:$0xff]
    %v1311 = vld [vmem:[#allocation8 + $0x2f0] sm:$0xff]
    %v1312 = vld [vmem:[#allocation8 + $0x2f8] sm:$0xff]
    %v1313 = vld [vmem:[#allocation8 + $0x300] sm:$0xff]
    %v1314 = vld [vmem:[#allocation8 + $0x308] sm:$0xff]
    %v1315 = vld [vmem:[#allocation8 + $0x310] sm:$0xff]
    %v1316 = vld [vmem:[#allocation8 + $0x318] sm:$0xff]
    %v1317 = vld [vmem:[#allocation8 + $0x320] sm:$0xff]
    %v1318 = vld [vmem:[#allocation8 + $0x328] sm:$0xff]
    %v1319 = vld [vmem:[#allocation8 + $0x330] sm:$0xff]
    %v1320 = vld [vmem:[#allocation8 + $0x338] sm:$0xff]
    %v1321 = vld [vmem:[#allocation8 + $0x340] sm:$0xff]
    %v1322 = vld [vmem:[#allocation8 + $0x348] sm:$0xff]
    %v1323 = vld [vmem:[#allocation8 + $0x350] sm:$0xff]
    %v1324 = vld [vmem:[#allocation8 + $0x358] sm:$0xff]
    %v1325 = vld [vmem:[#allocation8 + $0x360] sm:$0xff]
    %v1326 = vld [vmem:[#allocation8 + $0x368] sm:$0xff]
    %v1327 = vld [vmem:[#allocation8 + $0x370] sm:$0xff]
    %v1328 = vld [vmem:[#allocation8 + $0x378] sm:$0xff]
    %v1329 = vld [vmem:[#allocation8 + $0x380] sm:$0xff]
    %v1330 = vld [vmem:[#allocation8 + $0x388] sm:$0xff]
    %v1331 = vld [vmem:[#allocation8 + $0x390] sm:$0xff]
    %v1332 = vld [vmem:[#allocation8 + $0x398] sm:$0xff]
    %v1333 = vld [vmem:[#allocation8 + $0x3a0] sm:$0xff]
    %v1334 = vld [vmem:[#allocation8 + $0x3a8] sm:$0xff]
    %v1335 = vld [vmem:[#allocation8 + $0x3b0] sm:$0xff]
    %v1336 = vld [vmem:[#allocation8 + $0x3b8] sm:$0xff]
    %v1337 = vld [vmem:[#allocation8 + $0x3c0] sm:$0xff]
    %v1338 = vld [vmem:[#allocation8 + $0x3c8] sm:$0xff]
    %v1339 = vld [vmem:[#allocation8 + $0x3d0] sm:$0xff]
    %v1340 = vld [vmem:[#allocation8 + $0x3d8] sm:$0xff]
    %v1341 = vld [vmem:[#allocation8 + $0x3e0] sm:$0xff]
    %v1342 = vld [vmem:[#allocation8 + $0x3e8] sm:$0xff]
    %v1343 = vld [vmem:[#allocation8 + $0x3f0] sm:$0xff]
    %v1344 = vld [vmem:[#allocation8 + $0x3f8] sm:$0xff]
    %v1345 = vld [vmem:[#allocation10] sm:$0x1]
    %v1347 = vlaneseq
    %v1348 = vshrl.u32 %v1347, 7
    %v1349 = vsub.s32 0, %v1348
    %v1350 = vrot.slane %v1345, %v1349
    %1352 = vmatprep.subr.mxu0 0.0
    %1353 = vmatpush1.msra.mxu0 %v1217
    %1354 = vmatprep.subr.mxu0 0.0
    %1355 = vmatpush1.msra.mxu0 %v1218
    %1356 = vmatprep.subr.mxu0 0.0
    %1357 = vmatpush1.msra.mxu0 %v1219
    %1358 = vmatprep.subr.mxu0 0.0
    %1359 = vmatpush1.msra.mxu0 %v1220
    %1360 = vmatprep.subr.mxu0 0.0
    %1361 = vmatpush1.msra.mxu0 %v1221
    %1362 = vmatprep.subr.mxu0 0.0
    %1363 = vmatpush1.msra.mxu0 %v1222
    %1364 = vmatprep.subr.mxu0 0.0
    %1365 = vmatpush1.msra.mxu0 %v1223
    %1366 = vmatprep.subr.mxu0 0.0
    %1367 = vmatpush1.msra.mxu0 %v1224
    %1368 = vmatprep.subr.mxu0 0.0
    %1369 = vmatpush1.msra.mxu0 %v1225
    %1370 = vmatprep.subr.mxu0 0.0
    %1371 = vmatpush1.msra.mxu0 %v1226
    %1372 = vmatprep.subr.mxu0 0.0
    %1373 = vmatpush1.msra.mxu0 %v1227
    %1374 = vmatprep.subr.mxu0 0.0
    %1375 = vmatpush1.msra.mxu0 %v1228
    %1376 = vmatprep.subr.mxu0 0.0
    %1377 = vmatpush1.msra.mxu0 %v1229
    %1378 = vmatprep.subr.mxu0 0.0
    %1379 = vmatpush1.msra.mxu0 %v1230
    %1380 = vmatprep.subr.mxu0 0.0
    %1381 = vmatpush1.msra.mxu0 %v1231
    %1382 = vmatprep.subr.mxu0 0.0
    %1383 = vmatpush1.msra.mxu0 %v1232
    %1384 = vmatprep.subr.mxu0 0.0
    %1385 = vmatpush1.msra.mxu0 %v1233
    %1386 = vmatprep.subr.mxu0 0.0
    %1387 = vmatpush1.msra.mxu0 %v1234
    %1388 = vmatprep.subr.mxu0 0.0
    %1389 = vmatpush1.msra.mxu0 %v1235
    %1390 = vmatprep.subr.mxu0 0.0
    %1391 = vmatpush1.msra.mxu0 %v1236
    %1392 = vmatprep.subr.mxu0 0.0
    %1393 = vmatpush1.msra.mxu0 %v1237
    %1394 = vmatprep.subr.mxu0 0.0
    %1395 = vmatpush1.msra.mxu0 %v1238
    %1396 = vmatprep.subr.mxu0 0.0
    %1397 = vmatpush1.msra.mxu0 %v1239
    %1398 = vmatprep.subr.mxu0 0.0
    %1399 = vmatpush1.msra.mxu0 %v1240
    %1400 = vmatprep.subr.mxu0 0.0
    %1401 = vmatpush1.msra.mxu0 %v1241
    %1402 = vmatprep.subr.mxu0 0.0
    %1403 = vmatpush1.msra.mxu0 %v1242
    %1404 = vmatprep.subr.mxu0 0.0
    %1405 = vmatpush1.msra.mxu0 %v1243
    %1406 = vmatprep.subr.mxu0 0.0
    %1407 = vmatpush1.msra.mxu0 %v1244
    %1408 = vmatprep.subr.mxu0 0.0
    %1409 = vmatpush1.msra.mxu0 %v1245
    %1410 = vmatprep.subr.mxu0 0.0
    %1411 = vmatpush1.msra.mxu0 %v1246
    %1412 = vmatprep.subr.mxu0 0.0
    %1413 = vmatpush1.msra.mxu0 %v1247
    %1414 = vmatprep.subr.mxu0 0.0
    %1415 = vmatpush1.msra.mxu0 %v1248
    %1416 = vmatprep.mubr.f32.mxu0 %v1210
    %1417 = vmatmul.mubr.f32.gmra.mrb[0].mxu0 %v1209
    %v1418 = vpop.f32.mrb[0].mxu0
    %v1419 = vadd.f32 %v1350, %v1418
    %v1420 = vpop.f32.mrb[0].mxu0
    %1421 = vdwg.mxu0
    %1422 = vmatprep.subr.mxu0 0.0
    %1423 = vmatpush1.msra.mxu0 %v1249
    %1424 = vmatprep.subr.mxu0 0.0
    %1425 = vmatpush1.msra.mxu0 %v1250
    %1426 = vmatprep.subr.mxu0 0.0
    %1427 = vmatpush1.msra.mxu0 %v1251
    %1428 = vmatprep.subr.mxu0 0.0
    %1429 = vmatpush1.msra.mxu0 %v1252
    %1430 = vmatprep.subr.mxu0 0.0
    %1431 = vmatpush1.msra.mxu0 %v1253
    %1432 = vmatprep.subr.mxu0 0.0
    %1433 = vmatpush1.msra.mxu0 %v1254
    %1434 = vmatprep.subr.mxu0 0.0
    %1435 = vmatpush1.msra.mxu0 %v1255
    %1436 = vmatprep.subr.mxu0 0.0
    %1437 = vmatpush1.msra.mxu0 %v1256
    %1438 = vmatprep.subr.mxu0 0.0
    %1439 = vmatpush1.msra.mxu0 %v1257
    %1440 = vmatprep.subr.mxu0 0.0
    %1441 = vmatpush1.msra.mxu0 %v1258
    %1442 = vmatprep.subr.mxu0 0.0
    %1443 = vmatpush1.msra.mxu0 %v1259
    %1444 = vmatprep.subr.mxu0 0.0
    %1445 = vmatpush1.msra.mxu0 %v1260
    %1446 = vmatprep.subr.mxu0 0.0
    %1447 = vmatpush1.msra.mxu0 %v1261
    %1448 = vmatprep.subr.mxu0 0.0
    %1449 = vmatpush1.msra.mxu0 %v1262
    %1450 = vmatprep.subr.mxu0 0.0
    %1451 = vmatpush1.msra.mxu0 %v1263
    %1452 = vmatprep.subr.mxu0 0.0
    %1453 = vmatpush1.msra.mxu0 %v1264
    %1454 = vmatprep.subr.mxu0 0.0
    %1455 = vmatpush1.msra.mxu0 %v1265
    %1456 = vmatprep.subr.mxu0 0.0
    %1457 = vmatpush1.msra.mxu0 %v1266
    %1458 = vmatprep.subr.mxu0 0.0
    %1459 = vmatpush1.msra.mxu0 %v1267
    %1460 = vmatprep.subr.mxu0 0.0
    %1461 = vmatpush1.msra.mxu0 %v1268
    %1462 = vmatprep.subr.mxu0 0.0
    %1463 = vmatpush1.msra.mxu0 %v1269
    %1464 = vmatprep.subr.mxu0 0.0
    %1465 = vmatpush1.msra.mxu0 %v1270
    %1466 = vmatprep.subr.mxu0 0.0
    %1467 = vmatpush1.msra.mxu0 %v1271
    %1468 = vmatprep.subr.mxu0 0.0
    %1469 = vmatpush1.msra.mxu0 %v1272
    %1470 = vmatprep.subr.mxu0 0.0
    %1471 = vmatpush1.msra.mxu0 %v1273
    %1472 = vmatprep.subr.mxu0 0.0
    %1473 = vmatpush1.msra.mxu0 %v1274
    %1474 = vmatprep.subr.mxu0 0.0
    %1475 = vmatpush1.msra.mxu0 %v1275
    %1476 = vmatprep.subr.mxu0 0.0
    %1477 = vmatpush1.msra.mxu0 %v1276
    %1478 = vmatprep.subr.mxu0 0.0
    %1479 = vmatpush1.msra.mxu0 %v1277
    %1480 = vmatprep.subr.mxu0 0.0
    %1481 = vmatpush1.msra.mxu0 %v1278
    %1482 = vmatprep.subr.mxu0 0.0
    %1483 = vmatpush1.msra.mxu0 %v1279
    %1484 = vmatprep.subr.mxu0 0.0
    %1485 = vmatpush1.msra.mxu0 %v1280
    %1486 = vmatprep.mubr.f32.mxu0 %v1212
    %1487 = vmatmul.mubr.f32.gmra.mrb[0].mxu0 %v1211
    %v1488 = vpop.f32.mrb[0].mxu0
    %v1489 = vadd.f32 %v1419, %v1488
    %v1490 = vpop.f32.mrb[0].mxu0
    %1491 = vdwg.mxu0
    %1492 = vmatprep.subr.mxu0 0.0
    %1493 = vmatpush1.msra.mxu0 %v1281
    %1494 = vmatprep.subr.mxu0 0.0
    %1495 = vmatpush1.msra.mxu0 %v1282
    %1496 = vmatprep.subr.mxu0 0.0
    %1497 = vmatpush1.msra.mxu0 %v1283
    %1498 = vmatprep.subr.mxu0 0.0
    %1499 = vmatpush1.msra.mxu0 %v1284
    %1500 = vmatprep.subr.mxu0 0.0
    %1501 = vmatpush1.msra.mxu0 %v1285
    %1502 = vmatprep.subr.mxu0 0.0
    %1503 = vmatpush1.msra.mxu0 %v1286
    %1504 = vmatprep.subr.mxu0 0.0
    %1505 = vmatpush1.msra.mxu0 %v1287
    %1506 = vmatprep.subr.mxu0 0.0
    %1507 = vmatpush1.msra.mxu0 %v1288
    %1508 = vmatprep.subr.mxu0 0.0
    %1509 = vmatpush1.msra.mxu0 %v1289
    %1510 = vmatprep.subr.mxu0 0.0
    %1511 = vmatpush1.msra.mxu0 %v1290
    %1512 = vmatprep.subr.mxu0 0.0
    %1513 = vmatpush1.msra.mxu0 %v1291
    %1514 = vmatprep.subr.mxu0 0.0
    %1515 = vmatpush1.msra.mxu0 %v1292
    %1516 = vmatprep.subr.mxu0 0.0
    %1517 = vmatpush1.msra.mxu0 %v1293
    %1518 = vmatprep.subr.mxu0 0.0
    %1519 = vmatpush1.msra.mxu0 %v1294
    %1520 = vmatprep.subr.mxu0 0.0
    %1521 = vmatpush1.msra.mxu0 %v1295
    %1522 = vmatprep.subr.mxu0 0.0
    %1523 = vmatpush1.msra.mxu0 %v1296
    %1524 = vmatprep.subr.mxu0 0.0
    %1525 = vmatpush1.msra.mxu0 %v1297
    %1526 = vmatprep.subr.mxu0 0.0
    %1527 = vmatpush1.msra.mxu0 %v1298
    %1528 = vmatprep.subr.mxu0 0.0
    %1529 = vmatpush1.msra.mxu0 %v1299
    %1530 = vmatprep.subr.mxu0 0.0
    %1531 = vmatpush1.msra.mxu0 %v1300
    %1532 = vmatprep.subr.mxu0 0.0
    %1533 = vmatpush1.msra.mxu0 %v1301
    %1534 = vmatprep.subr.mxu0 0.0
    %1535 = vmatpush1.msra.mxu0 %v1302
    %1536 = vmatprep.subr.mxu0 0.0
    %1537 = vmatpush1.msra.mxu0 %v1303
    %1538 = vmatprep.subr.mxu0 0.0
    %1539 = vmatpush1.msra.mxu0 %v1304
    %1540 = vmatprep.subr.mxu0 0.0
    %1541 = vmatpush1.msra.mxu0 %v1305
    %1542 = vmatprep.subr.mxu0 0.0
    %1543 = vmatpush1.msra.mxu0 %v1306
    %1544 = vmatprep.subr.mxu0 0.0
    %1545 = vmatpush1.msra.mxu0 %v1307
    %1546 = vmatprep.subr.mxu0 0.0
    %1547 = vmatpush1.msra.mxu0 %v1308
    %1548 = vmatprep.subr.mxu0 0.0
    %1549 = vmatpush1.msra.mxu0 %v1309
    %1550 = vmatprep.subr.mxu0 0.0
    %1551 = vmatpush1.msra.mxu0 %v1310
    %1552 = vmatprep.subr.mxu0 0.0
    %1553 = vmatpush1.msra.mxu0 %v1311
    %1554 = vmatprep.subr.mxu0 0.0
    %1555 = vmatpush1.msra.mxu0 %v1312
    %1556 = vmatprep.mubr.f32.mxu0 %v1214
    %1557 = vmatmul.mubr.f32.gmra.mrb[0].mxu0 %v1213
    %v1558 = vpop.f32.mrb[0].mxu0
    %v1559 = vadd.f32 %v1489, %v1558
    %v1560 = vpop.f32.mrb[0].mxu0
    %1561 = vdwg.mxu0
    %1562 = vmatprep.subr.mxu0 0.0
    %1563 = vmatpush1.msra.mxu0 %v1313
    %1564 = vmatprep.subr.mxu0 0.0
    %1565 = vmatpush1.msra.mxu0 %v1314
    %1566 = vmatprep.subr.mxu0 0.0
    %1567 = vmatpush1.msra.mxu0 %v1315
    %1568 = vmatprep.subr.mxu0 0.0
    %1569 = vmatpush1.msra.mxu0 %v1316
    %1570 = vmatprep.subr.mxu0 0.0
    %1571 = vmatpush1.msra.mxu0 %v1317
    %1572 = vmatprep.subr.mxu0 0.0
    %1573 = vmatpush1.msra.mxu0 %v1318
    %1574 = vmatprep.subr.mxu0 0.0
    %1575 = vmatpush1.msra.mxu0 %v1319
    %1576 = vmatprep.subr.mxu0 0.0
    %1577 = vmatpush1.msra.mxu0 %v1320
    %1578 = vmatprep.subr.mxu0 0.0
    %1579 = vmatpush1.msra.mxu0 %v1321
    %1580 = vmatprep.subr.mxu0 0.0
    %1581 = vmatpush1.msra.mxu0 %v1322
    %1582 = vmatprep.subr.mxu0 0.0
    %1583 = vmatpush1.msra.mxu0 %v1323
    %1584 = vmatprep.subr.mxu0 0.0
    %1585 = vmatpush1.msra.mxu0 %v1324
    %1586 = vmatprep.subr.mxu0 0.0
    %1587 = vmatpush1.msra.mxu0 %v1325
    %1588 = vmatprep.subr.mxu0 0.0
    %1589 = vmatpush1.msra.mxu0 %v1326
    %1590 = vmatprep.subr.mxu0 0.0
    %1591 = vmatpush1.msra.mxu0 %v1327
    %1592 = vmatprep.subr.mxu0 0.0
    %1593 = vmatpush1.msra.mxu0 %v1328
    %1594 = vmatprep.subr.mxu0 0.0
    %1595 = vmatpush1.msra.mxu0 %v1329
    %1596 = vmatprep.subr.mxu0 0.0
    %1597 = vmatpush1.msra.mxu0 %v1330
    %1598 = vmatprep.subr.mxu0 0.0
    %1599 = vmatpush1.msra.mxu0 %v1331
    %1600 = vmatprep.subr.mxu0 0.0
    %1601 = vmatpush1.msra.mxu0 %v1332
    %1602 = vmatprep.subr.mxu0 0.0
    %1603 = vmatpush1.msra.mxu0 %v1333
    %1604 = vmatprep.subr.mxu0 0.0
    %1605 = vmatpush1.msra.mxu0 %v1334
    %1606 = vmatprep.subr.mxu0 0.0
    %1607 = vmatpush1.msra.mxu0 %v1335
    %1608 = vmatprep.subr.mxu0 0.0
    %1609 = vmatpush1.msra.mxu0 %v1336
    %1610 = vmatprep.subr.mxu0 0.0
    %1611 = vmatpush1.msra.mxu0 %v1337
    %1612 = vmatprep.subr.mxu0 0.0
    %1613 = vmatpush1.msra.mxu0 %v1338
    %1614 = vmatprep.subr.mxu0 0.0
    %1615 = vmatpush1.msra.mxu0 %v1339
    %1616 = vmatprep.subr.mxu0 0.0
    %1617 = vmatpush1.msra.mxu0 %v1340
    %1618 = vmatprep.subr.mxu0 0.0
    %1619 = vmatpush1.msra.mxu0 %v1341
    %1620 = vmatprep.subr.mxu0 0.0
    %1621 = vmatpush1.msra.mxu0 %v1342
    %1622 = vmatprep.subr.mxu0 0.0
    %1623 = vmatpush1.msra.mxu0 %v1343
    %1624 = vmatprep.subr.mxu0 0.0
    %1625 = vmatpush1.msra.mxu0 %v1344
    %1626 = vmatprep.mubr.f32.mxu0 %v1216
    %1627 = vmatmul.mubr.f32.gmra.mrb[0].mxu0 %v1215
    %v1628 = vpop.f32.mrb[0].mxu0
    %v1629 = vadd.f32 %v1559, %v1628
    %v1630 = vpop.f32.mrb[0].mxu0
    %1631 = vdwg.mxu0
    %1632 = vst [vmem:[#allocation11] sm:$0xff] %v1629
    // Predicated region
    $region42: #{tpu_custom_call.1} parent=1 // pred_check
      _
    $region43: #{tpu_custom_call.1} parent=1 // pred_check_branch
      %1634 = sbr.rel (0) target = $region45
    $region44: #{tpu_custom_call.1} parent=1 // pred_region
      %s1636 = ssub.s32 128, 128
      %1637 = vsyncadd [#allocation4], %s1636
      %s1639 = sshll.u32 [#allocation11], 4
      %s1640 = int_to_ptr.vmem [resolvable:$true] %s1639
      %1642 = dma.vmem_to_hbm [thread:$0]  %s1640, 128, %s5, [#allocation4]
    $region45: #{tpu_custom_call.1} parent=1 // pred_fallthru
      _
    // Predicated region
    $region46: #{tpu_custom_call.1} parent=1 // pred_check
      _
    $region47: #{tpu_custom_call.1} parent=1 // pred_check_branch
      %1644 = sbr.rel (0) target = $region49
    $region48: #{tpu_custom_call.1} parent=1 // pred_region
      %1645 = dma.done [#allocation4], 128
    $region49: #{tpu_custom_call.1} parent=1 // pred_fallthru
      _
    %1646 = vsyncpa [#allocation3], 1
    %1647 = vsyncpa [#allocation6], 1
    %1648 = vsyncpa [#allocation9], 1
    %1649 = vsyncpa [#allocation4], 1

</llo_original>
